<compile_context>
chip_gen: v6e
topology: v6e:2x2x1
jax: 0.10.0
libtpu: 0.0.40
codegen_flags: <defaults>
</compile_context>

<pallas_src>
import functools

import jax
import jax.numpy as jnp
from jax.experimental import pallas as pl
from jax.experimental.pallas import tpu as pltpu

EMBEDDING_SIZE = 10
HIDDEN_SIZE = 8
INPUT_SIZE = 4    # vocab size for the embedding
NUM_CLASS = 4
NUM_LAYERS = 2


def rnn_fused_kernel(idx_ref, emb_ref, wih0_ref, b0_ref, whh0_ref,
                     w1_ref, b1_ref, fcw_ref, fcb_ref,
                     out_ref, hcat_ref, hall_ref, *, batch, seqlen):
    """Embedding + 2-layer tanh RNN + Linear head, fused, single grid point.

    idx_ref : (T*B, 1) int32, time-major (row = t*B + b)
    emb_ref : (V, E)   embedding table
    wih0    : (E, H)   layer-0 input->hidden   (stored (in, out))
    b0      : (1, H)   layer-0 combined bias (b_ih + b_hh)
    whh0    : (H, H)   layer-0 hidden->hidden
    w1      : (2H, H)  layer-1 fused [w_ih1 ; w_hh1]
    b1      : (1, H)   layer-1 combined bias
    fcw     : (H, C), fcb: (1, C)
    out_ref : (T*B, C) time-major logits
    scratch : hcat_ref (B, 2H) fused layer-1 input state [h0 | h1_prev]
              hall_ref (T*B, H) all layer-1 hidden states (deferred FC head)
    """
    B, T = batch, seqlen
    H = whh0_ref.shape[0]
    V = emb_ref.shape[0]

    # ---- one-time, non-recurrent work (off the serialized chain) ----
    # Embedding lookup as a one-hot matmul (no separate XLA gather kernel).
    idx = idx_ref[...]                                           # (T*B, 1)
    vocab = jax.lax.broadcasted_iota(jnp.int32, (T * B, V), 1)   # (T*B, V)
    onehot = (idx == vocab).astype(jnp.float32)
    x_emb = jnp.dot(onehot, emb_ref[...],
                    preferred_element_type=jnp.float32)          # (T*B, E)
    # Layer-0 input projection for ALL timesteps, hoisted out of the recurrence.
    xproj = jnp.dot(x_emb, wih0_ref[...],
                    preferred_element_type=jnp.float32) + b0_ref[...]   # (T*B, H)

    # Hoist weight/bias loads out of the unrolled loop (no re-materialized
    # vld / broadcast per iteration).
    whh0 = whh0_ref[...]
    w1 = w1_ref[...]
    b1 = b1_ref[...]

    # ---- recurrence: 2 MXU dots per timestep (was 5) ----
    hcat_ref[...] = jnp.zeros((B, 2 * H), jnp.float32)   # h(0) = 0 for both layers
    h0 = jnp.zeros((B, H), jnp.float32)
    for t in range(T):  # T is small & static -> fully unrolled at trace time
        h0 = jnp.tanh(xproj[t * B:(t + 1) * B, :]
                      + jnp.dot(h0, whh0, preferred_element_type=jnp.float32))
        hcat_ref[:, :H] = h0                              # [h0(t) | h1(t-1)]
        h1 = jnp.tanh(jnp.dot(hcat_ref[...], w1,
                              preferred_element_type=jnp.float32) + b1)
        hcat_ref[:, H:] = h1                              # carry h1 to next step
        hall_ref[t * B:(t + 1) * B, :] = h1               # accumulate for FC head

    # ---- deferred FC head: one batched matmul + one contiguous store ----
    out_ref[...] = (jnp.dot(hall_ref[...], fcw_ref[...],
                            preferred_element_type=jnp.float32) + fcb_ref[...])


def init_params(key):
    ks = jax.random.split(key, 10)
    u = lambda k, shape, bound: jax.random.uniform(
        k, shape, jnp.float32, -bound, bound)
    kh = 1.0 / jnp.sqrt(HIDDEN_SIZE)
    params = dict(
        emb=jax.random.normal(ks[0], (INPUT_SIZE, EMBEDDING_SIZE), jnp.float32),
        # stored as (in, out); PyTorch stores (out, in) — transposed here.
        w_ih0=u(ks[1], (EMBEDDING_SIZE, HIDDEN_SIZE), kh),
        w_hh0=u(ks[2], (HIDDEN_SIZE, HIDDEN_SIZE), kh),
        b0=u(ks[3], (1, HIDDEN_SIZE), kh) + u(ks[4], (1, HIDDEN_SIZE), kh),
        w_ih1=u(ks[5], (HIDDEN_SIZE, HIDDEN_SIZE), kh),
        w_hh1=u(ks[6], (HIDDEN_SIZE, HIDDEN_SIZE), kh),
        b1=u(ks[7], (1, HIDDEN_SIZE), kh) + u(ks[8], (1, HIDDEN_SIZE), kh),
        fc_w=u(ks[9], (HIDDEN_SIZE, NUM_CLASS), kh),
        fc_b=jnp.zeros((1, NUM_CLASS), jnp.float32),
    )
    return params


@jax.jit
def model_forward(x_idx, params):
    B, T = x_idx.shape
    # Time-major indices so each timestep's rows are contiguous in-kernel.
    idx_tm = jnp.transpose(x_idx).reshape(T * B, 1).astype(jnp.int32)
    # Pre-stacked fused layer-1 weight [w_ih1 ; w_hh1] -> (2H, H) (outside the kernel).
    w1 = jnp.concatenate([params["w_ih1"], params["w_hh1"]], axis=0)

    vmem = pl.BlockSpec(memory_space=pltpu.MemorySpace.VMEM)
    kernel = functools.partial(rnn_fused_kernel, batch=B, seqlen=T)
    out_tm = pl.pallas_call(
        kernel,
        out_shape=jax.ShapeDtypeStruct((T * B, NUM_CLASS), jnp.float32),
        in_specs=[vmem] * 9,
        out_specs=vmem,
        scratch_shapes=[
            pltpu.VMEM((B, 2 * HIDDEN_SIZE), jnp.float32),   # fused layer-1 state
            pltpu.VMEM((T * B, HIDDEN_SIZE), jnp.float32),   # all h1 (deferred FC)
        ],
    )(idx_tm, params["emb"], params["w_ih0"], params["b0"], params["w_hh0"],
      w1, params["b1"], params["fc_w"], params["fc_b"])
    # Back to PyTorch ordering: (B, T, C).view(-1, C) i.e. row = b*T + t.
    out = jnp.transpose(out_tm.reshape(T, B, NUM_CLASS), (1, 0, 2))
    return out.reshape(B * T, NUM_CLASS)


def reference_forward(x_idx, params):
    x = params["emb"][x_idx]                        # (B, T, E)
    B, T, _ = x.shape
    h0 = jnp.zeros((B, HIDDEN_SIZE), jnp.float32)
    h1 = jnp.zeros((B, HIDDEN_SIZE), jnp.float32)
    outs = []
    for t in range(T):
        h0 = jnp.tanh(x[:, t, :] @ params["w_ih0"] + h0 @ params["w_hh0"]
                      + params["b0"])
        h1 = jnp.tanh(h0 @ params["w_ih1"] + h1 @ params["w_hh1"]
                      + params["b1"])
        outs.append(h1 @ params["fc_w"] + params["fc_b"])
    y = jnp.stack(outs, axis=1)                     # (B, T, C)
    return y.reshape(-1, NUM_CLASS)


if __name__ == "__main__":
    key = jax.random.PRNGKey(0)
    k_x, k_p = jax.random.split(key)
    B, T = 2, 8
    x_idx = jax.random.randint(k_x, (B, T), 0, INPUT_SIZE, dtype=jnp.int32)
    params = init_params(k_p)

    out = jax.block_until_ready(model_forward(x_idx, params))
    ref = reference_forward(x_idx, params)
    assert out.shape == (B * T, NUM_CLASS), out.shape
    assert jnp.allclose(out, ref, atol=1e-5, rtol=1e-5), "mismatch vs reference"
    print("KERNEL_OK")
</pallas_src>

<mosaic_0001>
module attributes {stable_mosaic.version = 11 : i64} {
  func.func @rnn_fused_kernel(%arg0: memref<16x1xi32, #tpu.memory_space<vmem>>, %arg1: memref<4x10xf32, #tpu.memory_space<vmem>>, %arg2: memref<10x8xf32, #tpu.memory_space<vmem>>, %arg3: memref<1x8xf32, #tpu.memory_space<vmem>>, %arg4: memref<8x8xf32, #tpu.memory_space<vmem>>, %arg5: memref<16x8xf32, #tpu.memory_space<vmem>>, %arg6: memref<1x8xf32, #tpu.memory_space<vmem>>, %arg7: memref<8x4xf32, #tpu.memory_space<vmem>>, %arg8: memref<1x4xf32, #tpu.memory_space<vmem>>, %arg9: memref<16x4xf32, #tpu.memory_space<vmem>>, %arg10: memref<2x16xf32, #tpu.memory_space<vmem>>, %arg11: memref<16x8xf32, #tpu.memory_space<vmem>>) attributes {dimension_semantics = [], scalar_prefetch = 0 : i64, scratch_operands = 2 : i64, tpu.core_type = #tpu.core_type<tc>} {
    %c0 = arith.constant 0 : index
    %c0_0 = arith.constant 0 : index
    %0 = vector.load %arg0[%c0, %c0_0] : memref<16x1xi32, #tpu.memory_space<vmem>>, vector<16x1xi32>
    %1 = tpu.iota {dimensions = array<i32: 1>} : vector<16x4xi32>
    %2 = vector.broadcast %0 : vector<16x1xi32> to vector<16x4xi32>
    %3 = arith.cmpi eq, %2, %1 : vector<16x4xi32>
    %4 = arith.extui %3 : vector<16x4xi1> to vector<16x4xi32>
    %5 = arith.sitofp %4 : vector<16x4xi32> to vector<16x4xf32>
    %c0_1 = arith.constant 0 : index
    %c0_2 = arith.constant 0 : index
    %6 = vector.load %arg1[%c0_1, %c0_2] : memref<4x10xf32, #tpu.memory_space<vmem>>, vector<4x10xf32>
    %cst = arith.constant dense<0.000000e+00> : vector<16x10xf32>
    %7 = tpu.matmul %5, %6, %cst {dimension_numbers = #tpu.dot_dimension_numbers<[1], [0], [0], [1], [0, 0, 1, 1], [], []>} : vector<16x4xf32>, vector<4x10xf32>, vector<16x10xf32> -> vector<16x10xf32>
    %c0_3 = arith.constant 0 : index
    %c0_4 = arith.constant 0 : index
    %8 = vector.load %arg2[%c0_3, %c0_4] : memref<10x8xf32, #tpu.memory_space<vmem>>, vector<10x8xf32>
    %cst_5 = arith.constant dense<0.000000e+00> : vector<16x8xf32>
    %9 = tpu.matmul %7, %8, %cst_5 {dimension_numbers = #tpu.dot_dimension_numbers<[1], [0], [0], [1], [0, 0, 1, 1], [], []>} : vector<16x10xf32>, vector<10x8xf32>, vector<16x8xf32> -> vector<16x8xf32>
    %c0_6 = arith.constant 0 : index
    %c0_7 = arith.constant 0 : index
    %10 = vector.load %arg3[%c0_6, %c0_7] : memref<1x8xf32, #tpu.memory_space<vmem>>, vector<1x8xf32>
    %11 = vector.broadcast %10 : vector<1x8xf32> to vector<16x8xf32>
    %12 = arith.addf %9, %11 : vector<16x8xf32>
    %c0_8 = arith.constant 0 : index
    %c0_9 = arith.constant 0 : index
    %13 = vector.load %arg4[%c0_8, %c0_9] : memref<8x8xf32, #tpu.memory_space<vmem>>, vector<8x8xf32>
    %c0_10 = arith.constant 0 : index
    %c0_11 = arith.constant 0 : index
    %14 = vector.load %arg5[%c0_10, %c0_11] : memref<16x8xf32, #tpu.memory_space<vmem>>, vector<16x8xf32>
    %c0_12 = arith.constant 0 : index
    %c0_13 = arith.constant 0 : index
    %15 = vector.load %arg6[%c0_12, %c0_13] : memref<1x8xf32, #tpu.memory_space<vmem>>, vector<1x8xf32>
    %cst_14 = arith.constant 0.000000e+00 : f32
    %16 = vector.broadcast %cst_14 : f32 to vector<2x16xf32>
    %c0_15 = arith.constant 0 : index
    %c0_16 = arith.constant 0 : index
    %17 = vector.load %arg10[%c0_15, %c0_16] : memref<2x16xf32, #tpu.memory_space<vmem>>, vector<2x16xf32>
    tpu.vector_store %arg10[%c0_15, %c0_16], %16 {strides = array<i32>} : memref<2x16xf32, #tpu.memory_space<vmem>>, vector<2x16xf32>,
    %cst_17 = arith.constant 0.000000e+00 : f32
    %18 = vector.broadcast %cst_17 : f32 to vector<2x8xf32>
    %19 = vector.extract_strided_slice %12 {offsets = [0, 0], sizes = [2, 8], strides = [1, 1]} : vector<16x8xf32> to vector<2x8xf32>
    %cst_18 = arith.constant dense<0.000000e+00> : vector<2x8xf32>
    %20 = tpu.matmul %18, %13, %cst_18 {dimension_numbers = #tpu.dot_dimension_numbers<[1], [0], [0], [1], [0, 0, 1, 1], [], []>} : vector<2x8xf32>, vector<8x8xf32>, vector<2x8xf32> -> vector<2x8xf32>
    %21 = arith.addf %19, %20 : vector<2x8xf32>
    %22 = math.tanh %21 : vector<2x8xf32>
    %c0_19 = arith.constant 0 : index
    %c0_20 = arith.constant 0 : index
    %23 = vector.load %arg10[%c0_19, %c0_20] : memref<2x16xf32, #tpu.memory_space<vmem>>, vector<2x8xf32>
    tpu.vector_store %arg10[%c0_19, %c0_20], %22 {strides = array<i32>} : memref<2x16xf32, #tpu.memory_space<vmem>>, vector<2x8xf32>,
    %c0_21 = arith.constant 0 : index
    %c0_22 = arith.constant 0 : index
    %24 = vector.load %arg10[%c0_21, %c0_22] : memref<2x16xf32, #tpu.memory_space<vmem>>, vector<2x16xf32>
    %cst_23 = arith.constant dense<0.000000e+00> : vector<2x8xf32>
    %25 = tpu.matmul %24, %14, %cst_23 {dimension_numbers = #tpu.dot_dimension_numbers<[1], [0], [0], [1], [0, 0, 1, 1], [], []>} : vector<2x16xf32>, vector<16x8xf32>, vector<2x8xf32> -> vector<2x8xf32>
    %26 = vector.broadcast %15 : vector<1x8xf32> to vector<2x8xf32>
    %27 = arith.addf %25, %26 : vector<2x8xf32>
    %28 = math.tanh %27 : vector<2x8xf32>
    %c0_24 = arith.constant 0 : index
    %c8 = arith.constant 8 : index
    %29 = vector.load %arg10[%c0_24, %c8] : memref<2x16xf32, #tpu.memory_space<vmem>>, vector<2x8xf32>
    tpu.vector_store %arg10[%c0_24, %c8], %28 {strides = array<i32>} : memref<2x16xf32, #tpu.memory_space<vmem>>, vector<2x8xf32>,
    %c0_25 = arith.constant 0 : index
    %c0_26 = arith.constant 0 : index
    %30 = vector.load %arg11[%c0_25, %c0_26] : memref<16x8xf32, #tpu.memory_space<vmem>>, vector<2x8xf32>
    tpu.vector_store %arg11[%c0_25, %c0_26], %28 {strides = array<i32>} : memref<16x8xf32, #tpu.memory_space<vmem>>, vector<2x8xf32>,
    %31 = vector.extract_strided_slice %12 {offsets = [2, 0], sizes = [2, 8], strides = [1, 1]} : vector<16x8xf32> to vector<2x8xf32>
    %cst_27 = arith.constant dense<0.000000e+00> : vector<2x8xf32>
    %32 = tpu.matmul %22, %13, %cst_27 {dimension_numbers = #tpu.dot_dimension_numbers<[1], [0], [0], [1], [0, 0, 1, 1], [], []>} : vector<2x8xf32>, vector<8x8xf32>, vector<2x8xf32> -> vector<2x8xf32>
    %33 = arith.addf %31, %32 : vector<2x8xf32>
    %34 = math.tanh %33 : vector<2x8xf32>
    %c0_28 = arith.constant 0 : index
    %c0_29 = arith.constant 0 : index
    %35 = vector.load %arg10[%c0_28, %c0_29] : memref<2x16xf32, #tpu.memory_space<vmem>>, vector<2x8xf32>
    tpu.vector_store %arg10[%c0_28, %c0_29], %34 {strides = array<i32>} : memref<2x16xf32, #tpu.memory_space<vmem>>, vector<2x8xf32>,
    %c0_30 = arith.constant 0 : index
    %c0_31 = arith.constant 0 : index
    %36 = vector.load %arg10[%c0_30, %c0_31] : memref<2x16xf32, #tpu.memory_space<vmem>>, vector<2x16xf32>
    %cst_32 = arith.constant dense<0.000000e+00> : vector<2x8xf32>
    %37 = tpu.matmul %36, %14, %cst_32 {dimension_numbers = #tpu.dot_dimension_numbers<[1], [0], [0], [1], [0, 0, 1, 1], [], []>} : vector<2x16xf32>, vector<16x8xf32>, vector<2x8xf32> -> vector<2x8xf32>
    %38 = vector.broadcast %15 : vector<1x8xf32> to vector<2x8xf32>
    %39 = arith.addf %37, %38 : vector<2x8xf32>
    %40 = math.tanh %39 : vector<2x8xf32>
    %c0_33 = arith.constant 0 : index
    %c8_34 = arith.constant 8 : index
    %41 = vector.load %arg10[%c0_33, %c8_34] : memref<2x16xf32, #tpu.memory_space<vmem>>, vector<2x8xf32>
    tpu.vector_store %arg10[%c0_33, %c8_34], %40 {strides = array<i32>} : memref<2x16xf32, #tpu.memory_space<vmem>>, vector<2x8xf32>,
    %c2 = arith.constant 2 : index
    %c0_35 = arith.constant 0 : index
    %42 = vector.load %arg11[%c2, %c0_35] : memref<16x8xf32, #tpu.memory_space<vmem>>, vector<2x8xf32>
    tpu.vector_store %arg11[%c2, %c0_35], %40 {strides = array<i32>} : memref<16x8xf32, #tpu.memory_space<vmem>>, vector<2x8xf32>,
    %43 = vector.extract_strided_slice %12 {offsets = [4, 0], sizes = [2, 8], strides = [1, 1]} : vector<16x8xf32> to vector<2x8xf32>
    %cst_36 = arith.constant dense<0.000000e+00> : vector<2x8xf32>
    %44 = tpu.matmul %34, %13, %cst_36 {dimension_numbers = #tpu.dot_dimension_numbers<[1], [0], [0], [1], [0, 0, 1, 1], [], []>} : vector<2x8xf32>, vector<8x8xf32>, vector<2x8xf32> -> vector<2x8xf32>
    %45 = arith.addf %43, %44 : vector<2x8xf32>
    %46 = math.tanh %45 : vector<2x8xf32>
    %c0_37 = arith.constant 0 : index
    %c0_38 = arith.constant 0 : index
    %47 = vector.load %arg10[%c0_37, %c0_38] : memref<2x16xf32, #tpu.memory_space<vmem>>, vector<2x8xf32>
    tpu.vector_store %arg10[%c0_37, %c0_38], %46 {strides = array<i32>} : memref<2x16xf32, #tpu.memory_space<vmem>>, vector<2x8xf32>,
    %c0_39 = arith.constant 0 : index
    %c0_40 = arith.constant 0 : index
    %48 = vector.load %arg10[%c0_39, %c0_40] : memref<2x16xf32, #tpu.memory_space<vmem>>, vector<2x16xf32>
    %cst_41 = arith.constant dense<0.000000e+00> : vector<2x8xf32>
    %49 = tpu.matmul %48, %14, %cst_41 {dimension_numbers = #tpu.dot_dimension_numbers<[1], [0], [0], [1], [0, 0, 1, 1], [], []>} : vector<2x16xf32>, vector<16x8xf32>, vector<2x8xf32> -> vector<2x8xf32>
    %50 = vector.broadcast %15 : vector<1x8xf32> to vector<2x8xf32>
    %51 = arith.addf %49, %50 : vector<2x8xf32>
    %52 = math.tanh %51 : vector<2x8xf32>
    %c0_42 = arith.constant 0 : index
    %c8_43 = arith.constant 8 : index
    %53 = vector.load %arg10[%c0_42, %c8_43] : memref<2x16xf32, #tpu.memory_space<vmem>>, vector<2x8xf32>
    tpu.vector_store %arg10[%c0_42, %c8_43], %52 {strides = array<i32>} : memref<2x16xf32, #tpu.memory_space<vmem>>, vector<2x8xf32>,
    %c4 = arith.constant 4 : index
    %c0_44 = arith.constant 0 : index
    %54 = vector.load %arg11[%c4, %c0_44] : memref<16x8xf32, #tpu.memory_space<vmem>>, vector<2x8xf32>
    tpu.vector_store %arg11[%c4, %c0_44], %52 {strides = array<i32>} : memref<16x8xf32, #tpu.memory_space<vmem>>, vector<2x8xf32>,
    %55 = vector.extract_strided_slice %12 {offsets = [6, 0], sizes = [2, 8], strides = [1, 1]} : vector<16x8xf32> to vector<2x8xf32>
    %cst_45 = arith.constant dense<0.000000e+00> : vector<2x8xf32>
    %56 = tpu.matmul %46, %13, %cst_45 {dimension_numbers = #tpu.dot_dimension_numbers<[1], [0], [0], [1], [0, 0, 1, 1], [], []>} : vector<2x8xf32>, vector<8x8xf32>, vector<2x8xf32> -> vector<2x8xf32>
    %57 = arith.addf %55, %56 : vector<2x8xf32>
    %58 = math.tanh %57 : vector<2x8xf32>
    %c0_46 = arith.constant 0 : index
    %c0_47 = arith.constant 0 : index
    %59 = vector.load %arg10[%c0_46, %c0_47] : memref<2x16xf32, #tpu.memory_space<vmem>>, vector<2x8xf32>
    tpu.vector_store %arg10[%c0_46, %c0_47], %58 {strides = array<i32>} : memref<2x16xf32, #tpu.memory_space<vmem>>, vector<2x8xf32>,
    %c0_48 = arith.constant 0 : index
    %c0_49 = arith.constant 0 : index
    %60 = vector.load %arg10[%c0_48, %c0_49] : memref<2x16xf32, #tpu.memory_space<vmem>>, vector<2x16xf32>
    %cst_50 = arith.constant dense<0.000000e+00> : vector<2x8xf32>
    %61 = tpu.matmul %60, %14, %cst_50 {dimension_numbers = #tpu.dot_dimension_numbers<[1], [0], [0], [1], [0, 0, 1, 1], [], []>} : vector<2x16xf32>, vector<16x8xf32>, vector<2x8xf32> -> vector<2x8xf32>
    %62 = vector.broadcast %15 : vector<1x8xf32> to vector<2x8xf32>
    %63 = arith.addf %61, %62 : vector<2x8xf32>
    %64 = math.tanh %63 : vector<2x8xf32>
    %c0_51 = arith.constant 0 : index
    %c8_52 = arith.constant 8 : index
    %65 = vector.load %arg10[%c0_51, %c8_52] : memref<2x16xf32, #tpu.memory_space<vmem>>, vector<2x8xf32>
    tpu.vector_store %arg10[%c0_51, %c8_52], %64 {strides = array<i32>} : memref<2x16xf32, #tpu.memory_space<vmem>>, vector<2x8xf32>,
    %c6 = arith.constant 6 : index
    %c0_53 = arith.constant 0 : index
    %66 = vector.load %arg11[%c6, %c0_53] : memref<16x8xf32, #tpu.memory_space<vmem>>, vector<2x8xf32>
    tpu.vector_store %arg11[%c6, %c0_53], %64 {strides = array<i32>} : memref<16x8xf32, #tpu.memory_space<vmem>>, vector<2x8xf32>,
    %67 = vector.extract_strided_slice %12 {offsets = [8, 0], sizes = [2, 8], strides = [1, 1]} : vector<16x8xf32> to vector<2x8xf32>
    %cst_54 = arith.constant dense<0.000000e+00> : vector<2x8xf32>
    %68 = tpu.matmul %58, %13, %cst_54 {dimension_numbers = #tpu.dot_dimension_numbers<[1], [0], [0], [1], [0, 0, 1, 1], [], []>} : vector<2x8xf32>, vector<8x8xf32>, vector<2x8xf32> -> vector<2x8xf32>
    %69 = arith.addf %67, %68 : vector<2x8xf32>
    %70 = math.tanh %69 : vector<2x8xf32>
    %c0_55 = arith.constant 0 : index
    %c0_56 = arith.constant 0 : index
    %71 = vector.load %arg10[%c0_55, %c0_56] : memref<2x16xf32, #tpu.memory_space<vmem>>, vector<2x8xf32>
    tpu.vector_store %arg10[%c0_55, %c0_56], %70 {strides = array<i32>} : memref<2x16xf32, #tpu.memory_space<vmem>>, vector<2x8xf32>,
    %c0_57 = arith.constant 0 : index
    %c0_58 = arith.constant 0 : index
    %72 = vector.load %arg10[%c0_57, %c0_58] : memref<2x16xf32, #tpu.memory_space<vmem>>, vector<2x16xf32>
    %cst_59 = arith.constant dense<0.000000e+00> : vector<2x8xf32>
    %73 = tpu.matmul %72, %14, %cst_59 {dimension_numbers = #tpu.dot_dimension_numbers<[1], [0], [0], [1], [0, 0, 1, 1], [], []>} : vector<2x16xf32>, vector<16x8xf32>, vector<2x8xf32> -> vector<2x8xf32>
    %74 = vector.broadcast %15 : vector<1x8xf32> to vector<2x8xf32>
    %75 = arith.addf %73, %74 : vector<2x8xf32>
    %76 = math.tanh %75 : vector<2x8xf32>
    %c0_60 = arith.constant 0 : index
    %c8_61 = arith.constant 8 : index
    %77 = vector.load %arg10[%c0_60, %c8_61] : memref<2x16xf32, #tpu.memory_space<vmem>>, vector<2x8xf32>
    tpu.vector_store %arg10[%c0_60, %c8_61], %76 {strides = array<i32>} : memref<2x16xf32, #tpu.memory_space<vmem>>, vector<2x8xf32>,
    %c8_62 = arith.constant 8 : index
    %c0_63 = arith.constant 0 : index
    %78 = vector.load %arg11[%c8_62, %c0_63] : memref<16x8xf32, #tpu.memory_space<vmem>>, vector<2x8xf32>
    tpu.vector_store %arg11[%c8_62, %c0_63], %76 {strides = array<i32>} : memref<16x8xf32, #tpu.memory_space<vmem>>, vector<2x8xf32>,
    %79 = vector.extract_strided_slice %12 {offsets = [10, 0], sizes = [2, 8], strides = [1, 1]} : vector<16x8xf32> to vector<2x8xf32>
    %cst_64 = arith.constant dense<0.000000e+00> : vector<2x8xf32>
    %80 = tpu.matmul %70, %13, %cst_64 {dimension_numbers = #tpu.dot_dimension_numbers<[1], [0], [0], [1], [0, 0, 1, 1], [], []>} : vector<2x8xf32>, vector<8x8xf32>, vector<2x8xf32> -> vector<2x8xf32>
    %81 = arith.addf %79, %80 : vector<2x8xf32>
    %82 = math.tanh %81 : vector<2x8xf32>
    %c0_65 = arith.constant 0 : index
    %c0_66 = arith.constant 0 : index
    %83 = vector.load %arg10[%c0_65, %c0_66] : memref<2x16xf32, #tpu.memory_space<vmem>>, vector<2x8xf32>
    tpu.vector_store %arg10[%c0_65, %c0_66], %82 {strides = array<i32>} : memref<2x16xf32, #tpu.memory_space<vmem>>, vector<2x8xf32>,
    %c0_67 = arith.constant 0 : index
    %c0_68 = arith.constant 0 : index
    %84 = vector.load %arg10[%c0_67, %c0_68] : memref<2x16xf32, #tpu.memory_space<vmem>>, vector<2x16xf32>
    %cst_69 = arith.constant dense<0.000000e+00> : vector<2x8xf32>
    %85 = tpu.matmul %84, %14, %cst_69 {dimension_numbers = #tpu.dot_dimension_numbers<[1], [0], [0], [1], [0, 0, 1, 1], [], []>} : vector<2x16xf32>, vector<16x8xf32>, vector<2x8xf32> -> vector<2x8xf32>
    %86 = vector.broadcast %15 : vector<1x8xf32> to vector<2x8xf32>
    %87 = arith.addf %85, %86 : vector<2x8xf32>
    %88 = math.tanh %87 : vector<2x8xf32>
    %c0_70 = arith.constant 0 : index
    %c8_71 = arith.constant 8 : index
    %89 = vector.load %arg10[%c0_70, %c8_71] : memref<2x16xf32, #tpu.memory_space<vmem>>, vector<2x8xf32>
    tpu.vector_store %arg10[%c0_70, %c8_71], %88 {strides = array<i32>} : memref<2x16xf32, #tpu.memory_space<vmem>>, vector<2x8xf32>,
    %c10 = arith.constant 10 : index
    %c0_72 = arith.constant 0 : index
    %90 = vector.load %arg11[%c10, %c0_72] : memref<16x8xf32, #tpu.memory_space<vmem>>, vector<2x8xf32>
    tpu.vector_store %arg11[%c10, %c0_72], %88 {strides = array<i32>} : memref<16x8xf32, #tpu.memory_space<vmem>>, vector<2x8xf32>,
    %91 = vector.extract_strided_slice %12 {offsets = [12, 0], sizes = [2, 8], strides = [1, 1]} : vector<16x8xf32> to vector<2x8xf32>
    %cst_73 = arith.constant dense<0.000000e+00> : vector<2x8xf32>
    %92 = tpu.matmul %82, %13, %cst_73 {dimension_numbers = #tpu.dot_dimension_numbers<[1], [0], [0], [1], [0, 0, 1, 1], [], []>} : vector<2x8xf32>, vector<8x8xf32>, vector<2x8xf32> -> vector<2x8xf32>
    %93 = arith.addf %91, %92 : vector<2x8xf32>
    %94 = math.tanh %93 : vector<2x8xf32>
    %c0_74 = arith.constant 0 : index
    %c0_75 = arith.constant 0 : index
    %95 = vector.load %arg10[%c0_74, %c0_75] : memref<2x16xf32, #tpu.memory_space<vmem>>, vector<2x8xf32>
    tpu.vector_store %arg10[%c0_74, %c0_75], %94 {strides = array<i32>} : memref<2x16xf32, #tpu.memory_space<vmem>>, vector<2x8xf32>,
    %c0_76 = arith.constant 0 : index
    %c0_77 = arith.constant 0 : index
    %96 = vector.load %arg10[%c0_76, %c0_77] : memref<2x16xf32, #tpu.memory_space<vmem>>, vector<2x16xf32>
    %cst_78 = arith.constant dense<0.000000e+00> : vector<2x8xf32>
    %97 = tpu.matmul %96, %14, %cst_78 {dimension_numbers = #tpu.dot_dimension_numbers<[1], [0], [0], [1], [0, 0, 1, 1], [], []>} : vector<2x16xf32>, vector<16x8xf32>, vector<2x8xf32> -> vector<2x8xf32>
    %98 = vector.broadcast %15 : vector<1x8xf32> to vector<2x8xf32>
    %99 = arith.addf %97, %98 : vector<2x8xf32>
    %100 = math.tanh %99 : vector<2x8xf32>
    %c0_79 = arith.constant 0 : index
    %c8_80 = arith.constant 8 : index
    %101 = vector.load %arg10[%c0_79, %c8_80] : memref<2x16xf32, #tpu.memory_space<vmem>>, vector<2x8xf32>
    tpu.vector_store %arg10[%c0_79, %c8_80], %100 {strides = array<i32>} : memref<2x16xf32, #tpu.memory_space<vmem>>, vector<2x8xf32>,
    %c12 = arith.constant 12 : index
    %c0_81 = arith.constant 0 : index
    %102 = vector.load %arg11[%c12, %c0_81] : memref<16x8xf32, #tpu.memory_space<vmem>>, vector<2x8xf32>
    tpu.vector_store %arg11[%c12, %c0_81], %100 {strides = array<i32>} : memref<16x8xf32, #tpu.memory_space<vmem>>, vector<2x8xf32>,
    %103 = vector.extract_strided_slice %12 {offsets = [14, 0], sizes = [2, 8], strides = [1, 1]} : vector<16x8xf32> to vector<2x8xf32>
    %cst_82 = arith.constant dense<0.000000e+00> : vector<2x8xf32>
    %104 = tpu.matmul %94, %13, %cst_82 {dimension_numbers = #tpu.dot_dimension_numbers<[1], [0], [0], [1], [0, 0, 1, 1], [], []>} : vector<2x8xf32>, vector<8x8xf32>, vector<2x8xf32> -> vector<2x8xf32>
    %105 = arith.addf %103, %104 : vector<2x8xf32>
    %106 = math.tanh %105 : vector<2x8xf32>
    %c0_83 = arith.constant 0 : index
    %c0_84 = arith.constant 0 : index
    %107 = vector.load %arg10[%c0_83, %c0_84] : memref<2x16xf32, #tpu.memory_space<vmem>>, vector<2x8xf32>
    tpu.vector_store %arg10[%c0_83, %c0_84], %106 {strides = array<i32>} : memref<2x16xf32, #tpu.memory_space<vmem>>, vector<2x8xf32>,
    %c0_85 = arith.constant 0 : index
    %c0_86 = arith.constant 0 : index
    %108 = vector.load %arg10[%c0_85, %c0_86] : memref<2x16xf32, #tpu.memory_space<vmem>>, vector<2x16xf32>
    %cst_87 = arith.constant dense<0.000000e+00> : vector<2x8xf32>
    %109 = tpu.matmul %108, %14, %cst_87 {dimension_numbers = #tpu.dot_dimension_numbers<[1], [0], [0], [1], [0, 0, 1, 1], [], []>} : vector<2x16xf32>, vector<16x8xf32>, vector<2x8xf32> -> vector<2x8xf32>
    %110 = vector.broadcast %15 : vector<1x8xf32> to vector<2x8xf32>
    %111 = arith.addf %109, %110 : vector<2x8xf32>
    %112 = math.tanh %111 : vector<2x8xf32>
    %c0_88 = arith.constant 0 : index
    %c8_89 = arith.constant 8 : index
    %113 = vector.load %arg10[%c0_88, %c8_89] : memref<2x16xf32, #tpu.memory_space<vmem>>, vector<2x8xf32>
    tpu.vector_store %arg10[%c0_88, %c8_89], %112 {strides = array<i32>} : memref<2x16xf32, #tpu.memory_space<vmem>>, vector<2x8xf32>,
    %c14 = arith.constant 14 : index
    %c0_90 = arith.constant 0 : index
    %114 = vector.load %arg11[%c14, %c0_90] : memref<16x8xf32, #tpu.memory_space<vmem>>, vector<2x8xf32>
    tpu.vector_store %arg11[%c14, %c0_90], %112 {strides = array<i32>} : memref<16x8xf32, #tpu.memory_space<vmem>>, vector<2x8xf32>,
    %c0_91 = arith.constant 0 : index
    %c0_92 = arith.constant 0 : index
    %115 = vector.load %arg11[%c0_91, %c0_92] : memref<16x8xf32, #tpu.memory_space<vmem>>, vector<16x8xf32>
    %c0_93 = arith.constant 0 : index
    %c0_94 = arith.constant 0 : index
    %116 = vector.load %arg7[%c0_93, %c0_94] : memref<8x4xf32, #tpu.memory_space<vmem>>, vector<8x4xf32>
    %cst_95 = arith.constant dense<0.000000e+00> : vector<16x4xf32>
    %117 = tpu.matmul %115, %116, %cst_95 {dimension_numbers = #tpu.dot_dimension_numbers<[1], [0], [0], [1], [0, 0, 1, 1], [], []>} : vector<16x8xf32>, vector<8x4xf32>, vector<16x4xf32> -> vector<16x4xf32>
    %c0_96 = arith.constant 0 : index
    %c0_97 = arith.constant 0 : index
    %118 = vector.load %arg8[%c0_96, %c0_97] : memref<1x4xf32, #tpu.memory_space<vmem>>, vector<1x4xf32>
    %119 = vector.broadcast %118 : vector<1x4xf32> to vector<16x4xf32>
    %120 = arith.addf %117, %119 : vector<16x4xf32>
    %c0_98 = arith.constant 0 : index
    %c0_99 = arith.constant 0 : index
    %121 = vector.load %arg9[%c0_98, %c0_99] : memref<16x4xf32, #tpu.memory_space<vmem>>, vector<16x4xf32>
    tpu.vector_store %arg9[%c0_98, %c0_99], %120 {strides = array<i32>} : memref<16x4xf32, #tpu.memory_space<vmem>>, vector<16x4xf32>,
    return
  }
}

</mosaic_0001>

<llo_original>
// kernel: model_forward.1
$region0: #{model_forward.1}
  #allocation0 [shape = 'u32[]', space=smem, size = 0x4, offset = 0x4, fixed_abs, tag = 'smem constant byte address 0x4 - core index']
  #allocation1 [shape = 'u32[144,128]{1,0:T(1,128)}', space=vmem, size = 0x12000, scoped, tag = 'internal scratch']
  #allocation2 [shape = 'f32[2,16]{1,0:T(2,128)}', space=vmem, size = 0x400, scoped, tag = 'scratch operand']
  #allocation3 [shape = 'f32[16,8]{1,0:T(8,128)}', space=vmem, size = 0x2000, scoped, tag = 'scratch operand']
  %s0 = inlined_call_operand.vmem [shape: s32[16,1], index: 0, kind: input, shape index: {}]
  %s1 = inlined_call_operand.vmem [shape: f32[4,10], index: 1, kind: input, shape index: {}]
  %s2 = inlined_call_operand.vmem [shape: f32[10,8], index: 2, kind: input, shape index: {}]
  %s3 = inlined_call_operand.vmem [shape: f32[1,8], index: 3, kind: input, shape index: {}]
  %s4 = inlined_call_operand.vmem [shape: f32[8,8], index: 4, kind: input, shape index: {}]
  %s5 = inlined_call_operand.vmem [shape: f32[16,8], index: 5, kind: input, shape index: {}]
  %s6 = inlined_call_operand.vmem [shape: f32[1,8], index: 6, kind: input, shape index: {}]
  %s7 = inlined_call_operand.vmem [shape: f32[8,4], index: 7, kind: input, shape index: {}]
  %s8 = inlined_call_operand.vmem [shape: f32[1,4], index: 8, kind: input, shape index: {}]
  %s9 = inlined_call_operand.vmem [shape: f32[16,4], index: 9, kind: output, shape index: {}]
  %s10 = sld [smem:[#allocation0]]
  $region46: #{model_forward.1} parent=0
    _
  %s12 = ssub.s32 1, %s10
  %s13 = scalar_select 0, %s12, %s10
  // Predicated region
  $region2: #{model_forward.1} parent=0 // pred_check
    _
  $region3: #{model_forward.1} parent=0 // pred_check_branch
    %15 = sbr.rel (0) target = $region5
  $region4: #{model_forward.1} parent=0 // pred_region
    _
  $region5: #{model_forward.1} parent=0 // pred_fallthru
    _
  // Predicated region
  $region6: #{model_forward.1} parent=0 // pred_check
    _
  $region7: #{model_forward.1} parent=0 // pred_check_branch
    %17 = sbr.rel (0) target = $region9
  $region8: #{model_forward.1} parent=0 // pred_region
    _
  $region9: #{model_forward.1} parent=0 // pred_fallthru
    _
  // Predicated region
  $region10: #{model_forward.1} parent=0 // pred_check
    _
  $region11: #{model_forward.1} parent=0 // pred_check_branch
    %19 = sbr.rel (0) target = $region13
  $region12: #{model_forward.1} parent=0 // pred_region
    _
  $region13: #{model_forward.1} parent=0 // pred_fallthru
    _
  // Predicated region
  $region14: #{model_forward.1} parent=0 // pred_check
    _
  $region15: #{model_forward.1} parent=0 // pred_check_branch
    %21 = sbr.rel (0) target = $region17
  $region16: #{model_forward.1} parent=0 // pred_region
    _
  $region17: #{model_forward.1} parent=0 // pred_fallthru
    _
  // Predicated region
  $region18: #{model_forward.1} parent=0 // pred_check
    _
  $region19: #{model_forward.1} parent=0 // pred_check_branch
    %23 = sbr.rel (0) target = $region21
  $region20: #{model_forward.1} parent=0 // pred_region
    _
  $region21: #{model_forward.1} parent=0 // pred_fallthru
    _
  // Predicated region
  $region22: #{model_forward.1} parent=0 // pred_check
    _
  $region23: #{model_forward.1} parent=0 // pred_check_branch
    %25 = sbr.rel (0) target = $region25
  $region24: #{model_forward.1} parent=0 // pred_region
    _
  $region25: #{model_forward.1} parent=0 // pred_fallthru
    _
  // Predicated region
  $region26: #{model_forward.1} parent=0 // pred_check
    _
  $region27: #{model_forward.1} parent=0 // pred_check_branch
    %27 = sbr.rel (0) target = $region29
  $region28: #{model_forward.1} parent=0 // pred_region
    _
  $region29: #{model_forward.1} parent=0 // pred_fallthru
    _
  // Predicated region
  $region30: #{model_forward.1} parent=0 // pred_check
    _
  $region31: #{model_forward.1} parent=0 // pred_check_branch
    %29 = sbr.rel (0) target = $region33
  $region32: #{model_forward.1} parent=0 // pred_region
    _
  $region33: #{model_forward.1} parent=0 // pred_fallthru
    _
  // Predicated region
  $region34: #{model_forward.1} parent=0 // pred_check
    _
  $region35: #{model_forward.1} parent=0 // pred_check_branch
    %31 = sbr.rel (0) target = $region37
  $region36: #{model_forward.1} parent=0 // pred_region
    _
  $region37: #{model_forward.1} parent=0 // pred_fallthru
    _
  %v32 = vld [vmem:[%s0] sm:$0xff]
  %v33 = vld [vmem:[%s0 + $0x8] sm:$0xff]
  %v34 = vlaneseq
  %v35 = vand.u32 %v34, 127
  %36 = vset.pattern.permute.xlu0 0
  %37 = vperm.xlu0 %36, %v32
  %v38 = vpop.permute.xlu0 %37
  %39 = vset.pattern.permute.xlu0 0
  %40 = vperm.xlu0 %39, %v33
  %v41 = vpop.permute.xlu0 %40
  %vm42 = vcmp.eq.s32.totalorder %v38, %v35
  %vm43 = vcmp.eq.s32.totalorder %v41, %v35
  %v44 = vsel %vm42, 1, 0
  %v45 = vsel %vm43, 1, 0
  %v46 = vcvt.s32.f32 %v44
  %v47 = vcvt.s32.f32 %v45
  %v48 = vld [vmem:[%s1] sm:$0xf]
  %vm49 = vcmask 31744
  %v51 = vsel %vm49, %v46, 0
  %v54 = vsel %vm49, %v47, 0
  %vm56 = vcmask 1043456
  %v58 = vsel %vm56, %v48, 0
  %60 = vmatprep.subr.mxu0 0.0
  %61 = vmatpush1.msra.mxu0 0.0
  %62 = vmatprep.subr.mxu0 0.0
  %63 = vmatpush1.msra.mxu0 0.0
  %64 = vmatprep.subr.mxu0 0.0
  %65 = vmatpush1.msra.mxu0 0.0
  %66 = vmatprep.subr.mxu0 0.0
  %67 = vmatpush1.msra.mxu0 0.0
  %68 = vmatprep.subr.mxu0 0.0
  %69 = vmatpush1.msra.mxu0 0.0
  %70 = vmatprep.subr.mxu0 0.0
  %71 = vmatpush1.msra.mxu0 0.0
  %72 = vmatprep.subr.mxu0 0.0
  %73 = vmatpush1.msra.mxu0 0.0
  %74 = vmatprep.subr.mxu0 0.0
  %75 = vmatpush1.msra.mxu0 0.0
  %76 = vmatprep.subr.mxu0 0.0
  %77 = vmatpush1.msra.mxu0 0.0
  %78 = vmatprep.subr.mxu0 0.0
  %79 = vmatpush1.msra.mxu0 0.0
  %80 = vmatprep.subr.mxu0 0.0
  %81 = vmatpush1.msra.mxu0 0.0
  %82 = vmatprep.subr.mxu0 0.0
  %83 = vmatpush1.msra.mxu0 0.0
  %84 = vmatprep.subr.mxu0 0.0
  %85 = vmatpush1.msra.mxu0 0.0
  %86 = vmatprep.subr.mxu0 0.0
  %87 = vmatpush1.msra.mxu0 0.0
  %88 = vmatprep.subr.mxu0 0.0
  %89 = vmatpush1.msra.mxu0 0.0
  %90 = vmatprep.subr.mxu0 0.0
  %91 = vmatpush1.msra.mxu0 %v58
  %92 = vmatprep.subr.mxu0 0.0
  %93 = vmatpush2.msra.mxu0 0.0
  %94 = vmatprep.subr.mxu0 0.0
  %95 = vmatpush2.msra.mxu0 0.0
  %96 = vmatprep.subr.mxu0 0.0
  %97 = vmatpush2.msra.mxu0 0.0
  %98 = vmatprep.subr.mxu0 0.0
  %99 = vmatpush2.msra.mxu0 0.0
  %100 = vmatprep.subr.mxu0 0.0
  %101 = vmatpush2.msra.mxu0 0.0
  %102 = vmatprep.subr.mxu0 0.0
  %103 = vmatpush2.msra.mxu0 0.0
  %104 = vmatprep.subr.mxu0 0.0
  %105 = vmatpush2.msra.mxu0 0.0
  %106 = vmatprep.subr.mxu0 0.0
  %107 = vmatpush2.msra.mxu0 0.0
  %108 = vmatprep.subr.mxu0 0.0
  %109 = vmatpush2.msra.mxu0 0.0
  %110 = vmatprep.subr.mxu0 0.0
  %111 = vmatpush2.msra.mxu0 0.0
  %112 = vmatprep.subr.mxu0 0.0
  %113 = vmatpush2.msra.mxu0 0.0
  %114 = vmatprep.subr.mxu0 0.0
  %115 = vmatpush2.msra.mxu0 0.0
  %116 = vmatprep.subr.mxu0 0.0
  %117 = vmatpush2.msra.mxu0 0.0
  %118 = vmatprep.subr.mxu0 0.0
  %119 = vmatpush2.msra.mxu0 0.0
  %120 = vmatprep.subr.mxu0 0.0
  %121 = vmatpush2.msra.mxu0 0.0
  %122 = vmatprep.subr.mxu0 0.0
  %123 = vmatpush2.msra.mxu0 0.0
  %124 = vmatprep.mubr.f32.mxu0 0.0
  %125 = vmatmul.mubr.f32.gmra.mxu0 %v51
  %v126 = vpop.f32.mrf.mxu0
  %v127 = vadd.f32 0.0, %v126
  %v128 = vpop.f32.mrf.mxu0
  %129 = vmatprep.mubr.f32.mxu0 0.0
  %130 = vmatmul.mubr.f32.gmra.mxu0 %v54
  %v131 = vpop.f32.mrf.mxu0
  %v132 = vadd.f32 0.0, %v131
  %v133 = vpop.f32.mrf.mxu0
  %134 = vdwg.mxu0
  %v135 = vld [vmem:[%s2] sm:$0xff]
  %v136 = vld [vmem:[%s2 + $0x8] sm:$0x3]
  %v137 = vld [vmem:[%s3] sm:$0x1]
  %v139 = vlaneseq
  %v140 = vshrl.u32 %v139, 7
  %v141 = vsub.s32 0, %v140
  %v142 = vrot.slane %v137, %v141
  %vm144 = vcmask 80896
  %v146 = vsel %vm144, %v127, 0
  %v149 = vsel %vm144, %v132, 0
  %vm151 = vcmask 1041408
  %v153 = vsel %vm151, %v136, 0
  %155 = vmatprep.subr.mxu0 0.0
  %156 = vmatpush1.msra.mxu0 0.0
  %157 = vmatprep.subr.mxu0 0.0
  %158 = vmatpush1.msra.mxu0 0.0
  %159 = vmatprep.subr.mxu0 0.0
  %160 = vmatpush1.msra.mxu0 0.0
  %161 = vmatprep.subr.mxu0 0.0
  %162 = vmatpush1.msra.mxu0 0.0
  %163 = vmatprep.subr.mxu0 0.0
  %164 = vmatpush1.msra.mxu0 0.0
  %165 = vmatprep.subr.mxu0 0.0
  %166 = vmatpush1.msra.mxu0 0.0
  %167 = vmatprep.subr.mxu0 0.0
  %168 = vmatpush1.msra.mxu0 0.0
  %169 = vmatprep.subr.mxu0 0.0
  %170 = vmatpush1.msra.mxu0 0.0
  %171 = vmatprep.subr.mxu0 0.0
  %172 = vmatpush1.msra.mxu0 0.0
  %173 = vmatprep.subr.mxu0 0.0
  %174 = vmatpush1.msra.mxu0 0.0
  %175 = vmatprep.subr.mxu0 0.0
  %176 = vmatpush1.msra.mxu0 0.0
  %177 = vmatprep.subr.mxu0 0.0
  %178 = vmatpush1.msra.mxu0 0.0
  %179 = vmatprep.subr.mxu0 0.0
  %180 = vmatpush1.msra.mxu0 0.0
  %181 = vmatprep.subr.mxu0 0.0
  %182 = vmatpush1.msra.mxu0 0.0
  %183 = vmatprep.subr.mxu0 0.0
  %184 = vmatpush1.msra.mxu0 %v153
  %185 = vmatprep.subr.mxu0 0.0
  %186 = vmatpush1.msra.mxu0 %v135
  %187 = vmatprep.subr.mxu0 0.0
  %188 = vmatpush2.msra.mxu0 0.0
  %189 = vmatprep.subr.mxu0 0.0
  %190 = vmatpush2.msra.mxu0 0.0
  %191 = vmatprep.subr.mxu0 0.0
  %192 = vmatpush2.msra.mxu0 0.0
  %193 = vmatprep.subr.mxu0 0.0
  %194 = vmatpush2.msra.mxu0 0.0
  %195 = vmatprep.subr.mxu0 0.0
  %196 = vmatpush2.msra.mxu0 0.0
  %197 = vmatprep.subr.mxu0 0.0
  %198 = vmatpush2.msra.mxu0 0.0
  %199 = vmatprep.subr.mxu0 0.0
  %200 = vmatpush2.msra.mxu0 0.0
  %201 = vmatprep.subr.mxu0 0.0
  %202 = vmatpush2.msra.mxu0 0.0
  %203 = vmatprep.subr.mxu0 0.0
  %204 = vmatpush2.msra.mxu0 0.0
  %205 = vmatprep.subr.mxu0 0.0
  %206 = vmatpush2.msra.mxu0 0.0
  %207 = vmatprep.subr.mxu0 0.0
  %208 = vmatpush2.msra.mxu0 0.0
  %209 = vmatprep.subr.mxu0 0.0
  %210 = vmatpush2.msra.mxu0 0.0
  %211 = vmatprep.subr.mxu0 0.0
  %212 = vmatpush2.msra.mxu0 0.0
  %213 = vmatprep.subr.mxu0 0.0
  %214 = vmatpush2.msra.mxu0 0.0
  %215 = vmatprep.subr.mxu0 0.0
  %216 = vmatpush2.msra.mxu0 0.0
  %217 = vmatprep.subr.mxu0 0.0
  %218 = vmatpush2.msra.mxu0 0.0
  %219 = vmatprep.mubr.f32.mxu0 0.0
  %220 = vmatmul.mubr.f32.gmra.mxu0 %v146
  %v221 = vpop.f32.mrf.mxu0
  %v222 = vadd.f32 %v142, %v221
  %v223 = vpop.f32.mrf.mxu0
  %224 = vmatprep.mubr.f32.mxu0 0.0
  %225 = vmatmul.mubr.f32.gmra.mxu0 %v149
  %v226 = vpop.f32.mrf.mxu0
  %v227 = vadd.f32 %v142, %v226
  %v228 = vpop.f32.mrf.mxu0
  %229 = vdwg.mxu0
  %v230 = vld [vmem:[%s4] sm:$0xff]
  %v231 = vld [vmem:[%s5] sm:$0xff]
  %v232 = vld [vmem:[%s5 + $0x8] sm:$0xff]
  %v233 = vld [vmem:[%s6] sm:$0x1]
  %vm234 = vcmask 123904
  %235 = vst.msk [vmem:[#allocation2] sm:$0x3] %vm234, 0.0
  %vm236 = vcmask 64512
  %v238 = vsel %vm236, 0.0, 0
  %240 = vmatprep.subr.mxu0 0.0
  %241 = vmatpush1.msra.mxu0 0.0
  %242 = vmatprep.subr.mxu0 0.0
  %243 = vmatpush1.msra.mxu0 0.0
  %244 = vmatprep.subr.mxu0 0.0
  %245 = vmatpush1.msra.mxu0 0.0
  %246 = vmatprep.subr.mxu0 0.0
  %247 = vmatpush1.msra.mxu0 0.0
  %248 = vmatprep.subr.mxu0 0.0
  %249 = vmatpush1.msra.mxu0 0.0
  %250 = vmatprep.subr.mxu0 0.0
  %251 = vmatpush1.msra.mxu0 0.0
  %252 = vmatprep.subr.mxu0 0.0
  %253 = vmatpush1.msra.mxu0 0.0
  %254 = vmatprep.subr.mxu0 0.0
  %255 = vmatpush1.msra.mxu0 0.0
  %256 = vmatprep.subr.mxu0 0.0
  %257 = vmatpush1.msra.mxu0 0.0
  %258 = vmatprep.subr.mxu0 0.0
  %259 = vmatpush1.msra.mxu0 0.0
  %260 = vmatprep.subr.mxu0 0.0
  %261 = vmatpush1.msra.mxu0 0.0
  %262 = vmatprep.subr.mxu0 0.0
  %263 = vmatpush1.msra.mxu0 0.0
  %264 = vmatprep.subr.mxu0 0.0
  %265 = vmatpush1.msra.mxu0 0.0
  %266 = vmatprep.subr.mxu0 0.0
  %267 = vmatpush1.msra.mxu0 0.0
  %268 = vmatprep.subr.mxu0 0.0
  %269 = vmatpush1.msra.mxu0 0.0
  %270 = vmatprep.subr.mxu0 0.0
  %271 = vmatpush1.msra.mxu0 %v230
  %272 = vmatprep.subr.mxu0 0.0
  %273 = vmatpush2.msra.mxu0 0.0
  %274 = vmatprep.subr.mxu0 0.0
  %275 = vmatpush2.msra.mxu0 0.0
  %276 = vmatprep.subr.mxu0 0.0
  %277 = vmatpush2.msra.mxu0 0.0
  %278 = vmatprep.subr.mxu0 0.0
  %279 = vmatpush2.msra.mxu0 0.0
  %280 = vmatprep.subr.mxu0 0.0
  %281 = vmatpush2.msra.mxu0 0.0
  %282 = vmatprep.subr.mxu0 0.0
  %283 = vmatpush2.msra.mxu0 0.0
  %284 = vmatprep.subr.mxu0 0.0
  %285 = vmatpush2.msra.mxu0 0.0
  %286 = vmatprep.subr.mxu0 0.0
  %287 = vmatpush2.msra.mxu0 0.0
  %288 = vmatprep.subr.mxu0 0.0
  %289 = vmatpush2.msra.mxu0 0.0
  %290 = vmatprep.subr.mxu0 0.0
  %291 = vmatpush2.msra.mxu0 0.0
  %292 = vmatprep.subr.mxu0 0.0
  %293 = vmatpush2.msra.mxu0 0.0
  %294 = vmatprep.subr.mxu0 0.0
  %295 = vmatpush2.msra.mxu0 0.0
  %296 = vmatprep.subr.mxu0 0.0
  %297 = vmatpush2.msra.mxu0 0.0
  %298 = vmatprep.subr.mxu0 0.0
  %299 = vmatpush2.msra.mxu0 0.0
  %300 = vmatprep.subr.mxu0 0.0
  %301 = vmatpush2.msra.mxu0 0.0
  %302 = vmatprep.subr.mxu0 0.0
  %303 = vmatpush2.msra.mxu0 0.0
  %304 = vmatprep.mubr.f32.mxu0 0.0
  %305 = vmatmul.mubr.f32.gmra.mxu0 %v238
  %v306 = vpop.f32.mrf.mxu0
  %v307 = vadd.f32 0.0, %v306
  %v308 = vpop.f32.mrf.mxu0
  %309 = vdwg.mxu0
  %v310 = vadd.f32 %v222, %v307
  %v311 = vtanh.pop %v310
  %vm312 = vcmask 58368
  %313 = vst.msk [vmem:[#allocation2] sm:$0x3] %vm312, %v311
  %v314 = vld [vmem:[#allocation2] sm:$0x3]
  %v316 = vlaneseq
  %v317 = vshrl.u32 %v316, 7
  %v318 = vsub.s32 0, %v317
  %v319 = vrot.slane %v233, %v318
  %vm321 = vcmask 130048
  %v323 = vsel %vm321, %v314, 0
  %325 = vmatprep.subr.mxu0 0.0
  %326 = vmatpush1.msra.mxu0 0.0
  %327 = vmatprep.subr.mxu0 0.0
  %328 = vmatpush1.msra.mxu0 0.0
  %329 = vmatprep.subr.mxu0 0.0
  %330 = vmatpush1.msra.mxu0 0.0
  %331 = vmatprep.subr.mxu0 0.0
  %332 = vmatpush1.msra.mxu0 0.0
  %333 = vmatprep.subr.mxu0 0.0
  %334 = vmatpush1.msra.mxu0 0.0
  %335 = vmatprep.subr.mxu0 0.0
  %336 = vmatpush1.msra.mxu0 0.0
  %337 = vmatprep.subr.mxu0 0.0
  %338 = vmatpush1.msra.mxu0 0.0
  %339 = vmatprep.subr.mxu0 0.0
  %340 = vmatpush1.msra.mxu0 0.0
  %341 = vmatprep.subr.mxu0 0.0
  %342 = vmatpush1.msra.mxu0 0.0
  %343 = vmatprep.subr.mxu0 0.0
  %344 = vmatpush1.msra.mxu0 0.0
  %345 = vmatprep.subr.mxu0 0.0
  %346 = vmatpush1.msra.mxu0 0.0
  %347 = vmatprep.subr.mxu0 0.0
  %348 = vmatpush1.msra.mxu0 0.0
  %349 = vmatprep.subr.mxu0 0.0
  %350 = vmatpush1.msra.mxu0 0.0
  %351 = vmatprep.subr.mxu0 0.0
  %352 = vmatpush1.msra.mxu0 0.0
  %353 = vmatprep.subr.mxu0 0.0
  %354 = vmatpush1.msra.mxu0 %v232
  %355 = vmatprep.subr.mxu0 0.0
  %356 = vmatpush1.msra.mxu0 %v231
  %357 = vmatprep.subr.mxu0 0.0
  %358 = vmatpush2.msra.mxu0 0.0
  %359 = vmatprep.subr.mxu0 0.0
  %360 = vmatpush2.msra.mxu0 0.0
  %361 = vmatprep.subr.mxu0 0.0
  %362 = vmatpush2.msra.mxu0 0.0
  %363 = vmatprep.subr.mxu0 0.0
  %364 = vmatpush2.msra.mxu0 0.0
  %365 = vmatprep.subr.mxu0 0.0
  %366 = vmatpush2.msra.mxu0 0.0
  %367 = vmatprep.subr.mxu0 0.0
  %368 = vmatpush2.msra.mxu0 0.0
  %369 = vmatprep.subr.mxu0 0.0
  %370 = vmatpush2.msra.mxu0 0.0
  %371 = vmatprep.subr.mxu0 0.0
  %372 = vmatpush2.msra.mxu0 0.0
  %373 = vmatprep.subr.mxu0 0.0
  %374 = vmatpush2.msra.mxu0 0.0
  %375 = vmatprep.subr.mxu0 0.0
  %376 = vmatpush2.msra.mxu0 0.0
  %377 = vmatprep.subr.mxu0 0.0
  %378 = vmatpush2.msra.mxu0 0.0
  %379 = vmatprep.subr.mxu0 0.0
  %380 = vmatpush2.msra.mxu0 0.0
  %381 = vmatprep.subr.mxu0 0.0
  %382 = vmatpush2.msra.mxu0 0.0
  %383 = vmatprep.subr.mxu0 0.0
  %384 = vmatpush2.msra.mxu0 0.0
  %385 = vmatprep.subr.mxu0 0.0
  %386 = vmatpush2.msra.mxu0 0.0
  %387 = vmatprep.subr.mxu0 0.0
  %388 = vmatpush2.msra.mxu0 0.0
  %389 = vmatprep.mubr.f32.mxu0 0.0
  %390 = vmatmul.mubr.f32.gmra.mxu0 %v323
  %v391 = vpop.f32.mrf.mxu0
  %v392 = vadd.f32 %v319, %v391
  %v393 = vpop.f32.mrf.mxu0
  %394 = vdwg.mxu0
  %v395 = vtanh.pop %v392
  %397 = vrot.lane.b32.xlu0 %v395, 8
  %v398 = vpop.permute.xlu0 %397
  %vm400 = vcmask 123968
  %401 = vst.msk [vmem:[#allocation2] sm:$0x3] %vm400, %v398
  %402 = vst.msk [vmem:[#allocation3] sm:$0x3] %vm312, %v395
  %v404 = vsel %vm236, %v311, 0
  %406 = vmatprep.subr.mxu0 0.0
  %407 = vmatpush1.msra.mxu0 0.0
  %408 = vmatprep.subr.mxu0 0.0
  %409 = vmatpush1.msra.mxu0 0.0
  %410 = vmatprep.subr.mxu0 0.0
  %411 = vmatpush1.msra.mxu0 0.0
  %412 = vmatprep.subr.mxu0 0.0
  %413 = vmatpush1.msra.mxu0 0.0
  %414 = vmatprep.subr.mxu0 0.0
  %415 = vmatpush1.msra.mxu0 0.0
  %416 = vmatprep.subr.mxu0 0.0
  %417 = vmatpush1.msra.mxu0 0.0
  %418 = vmatprep.subr.mxu0 0.0
  %419 = vmatpush1.msra.mxu0 0.0
  %420 = vmatprep.subr.mxu0 0.0
  %421 = vmatpush1.msra.mxu0 0.0
  %422 = vmatprep.subr.mxu0 0.0
  %423 = vmatpush1.msra.mxu0 0.0
  %424 = vmatprep.subr.mxu0 0.0
  %425 = vmatpush1.msra.mxu0 0.0
  %426 = vmatprep.subr.mxu0 0.0
  %427 = vmatpush1.msra.mxu0 0.0
  %428 = vmatprep.subr.mxu0 0.0
  %429 = vmatpush1.msra.mxu0 0.0
  %430 = vmatprep.subr.mxu0 0.0
  %431 = vmatpush1.msra.mxu0 0.0
  %432 = vmatprep.subr.mxu0 0.0
  %433 = vmatpush1.msra.mxu0 0.0
  %434 = vmatprep.subr.mxu0 0.0
  %435 = vmatpush1.msra.mxu0 0.0
  %436 = vmatprep.subr.mxu0 0.0
  %437 = vmatpush1.msra.mxu0 %v230
  %438 = vmatprep.subr.mxu0 0.0
  %439 = vmatpush2.msra.mxu0 0.0
  %440 = vmatprep.subr.mxu0 0.0
  %441 = vmatpush2.msra.mxu0 0.0
  %442 = vmatprep.subr.mxu0 0.0
  %443 = vmatpush2.msra.mxu0 0.0
  %444 = vmatprep.subr.mxu0 0.0
  %445 = vmatpush2.msra.mxu0 0.0
  %446 = vmatprep.subr.mxu0 0.0
  %447 = vmatpush2.msra.mxu0 0.0
  %448 = vmatprep.subr.mxu0 0.0
  %449 = vmatpush2.msra.mxu0 0.0
  %450 = vmatprep.subr.mxu0 0.0
  %451 = vmatpush2.msra.mxu0 0.0
  %452 = vmatprep.subr.mxu0 0.0
  %453 = vmatpush2.msra.mxu0 0.0
  %454 = vmatprep.subr.mxu0 0.0
  %455 = vmatpush2.msra.mxu0 0.0
  %456 = vmatprep.subr.mxu0 0.0
  %457 = vmatpush2.msra.mxu0 0.0
  %458 = vmatprep.subr.mxu0 0.0
  %459 = vmatpush2.msra.mxu0 0.0
  %460 = vmatprep.subr.mxu0 0.0
  %461 = vmatpush2.msra.mxu0 0.0
  %462 = vmatprep.subr.mxu0 0.0
  %463 = vmatpush2.msra.mxu0 0.0
  %464 = vmatprep.subr.mxu0 0.0
  %465 = vmatpush2.msra.mxu0 0.0
  %466 = vmatprep.subr.mxu0 0.0
  %467 = vmatpush2.msra.mxu0 0.0
  %468 = vmatprep.subr.mxu0 0.0
  %469 = vmatpush2.msra.mxu0 0.0
  %470 = vmatprep.mubr.f32.mxu0 0.0
  %471 = vmatmul.mubr.f32.gmra.mxu0 %v404
  %v472 = vpop.f32.mrf.mxu0
  %v473 = vadd.f32 0.0, %v472
  %v474 = vpop.f32.mrf.mxu0
  %475 = vdwg.mxu0
  %v477 = vrot.slane %v473, 6
  %v479 = vadd.f32 %v222, %v477
  %v480 = vtanh.pop %v479
  %vm481 = vcmask 60418
  %482 = vst.msk [vmem:[#allocation2 - $0x2] sm:$0xc] %vm481, %v480
  %v483 = vld [vmem:[#allocation2] sm:$0x3]
  %v485 = vsel %vm321, %v483, 0
  %487 = vmatprep.subr.mxu0 0.0
  %488 = vmatpush1.msra.mxu0 0.0
  %489 = vmatprep.subr.mxu0 0.0
  %490 = vmatpush1.msra.mxu0 0.0
  %491 = vmatprep.subr.mxu0 0.0
  %492 = vmatpush1.msra.mxu0 0.0
  %493 = vmatprep.subr.mxu0 0.0
  %494 = vmatpush1.msra.mxu0 0.0
  %495 = vmatprep.subr.mxu0 0.0
  %496 = vmatpush1.msra.mxu0 0.0
  %497 = vmatprep.subr.mxu0 0.0
  %498 = vmatpush1.msra.mxu0 0.0
  %499 = vmatprep.subr.mxu0 0.0
  %500 = vmatpush1.msra.mxu0 0.0
  %501 = vmatprep.subr.mxu0 0.0
  %502 = vmatpush1.msra.mxu0 0.0
  %503 = vmatprep.subr.mxu0 0.0
  %504 = vmatpush1.msra.mxu0 0.0
  %505 = vmatprep.subr.mxu0 0.0
  %506 = vmatpush1.msra.mxu0 0.0
  %507 = vmatprep.subr.mxu0 0.0
  %508 = vmatpush1.msra.mxu0 0.0
  %509 = vmatprep.subr.mxu0 0.0
  %510 = vmatpush1.msra.mxu0 0.0
  %511 = vmatprep.subr.mxu0 0.0
  %512 = vmatpush1.msra.mxu0 0.0
  %513 = vmatprep.subr.mxu0 0.0
  %514 = vmatpush1.msra.mxu0 0.0
  %515 = vmatprep.subr.mxu0 0.0
  %516 = vmatpush1.msra.mxu0 %v232
  %517 = vmatprep.subr.mxu0 0.0
  %518 = vmatpush1.msra.mxu0 %v231
  %519 = vmatprep.subr.mxu0 0.0
  %520 = vmatpush2.msra.mxu0 0.0
  %521 = vmatprep.subr.mxu0 0.0
  %522 = vmatpush2.msra.mxu0 0.0
  %523 = vmatprep.subr.mxu0 0.0
  %524 = vmatpush2.msra.mxu0 0.0
  %525 = vmatprep.subr.mxu0 0.0
  %526 = vmatpush2.msra.mxu0 0.0
  %527 = vmatprep.subr.mxu0 0.0
  %528 = vmatpush2.msra.mxu0 0.0
  %529 = vmatprep.subr.mxu0 0.0
  %530 = vmatpush2.msra.mxu0 0.0
  %531 = vmatprep.subr.mxu0 0.0
  %532 = vmatpush2.msra.mxu0 0.0
  %533 = vmatprep.subr.mxu0 0.0
  %534 = vmatpush2.msra.mxu0 0.0
  %535 = vmatprep.subr.mxu0 0.0
  %536 = vmatpush2.msra.mxu0 0.0
  %537 = vmatprep.subr.mxu0 0.0
  %538 = vmatpush2.msra.mxu0 0.0
  %539 = vmatprep.subr.mxu0 0.0
  %540 = vmatpush2.msra.mxu0 0.0
  %541 = vmatprep.subr.mxu0 0.0
  %542 = vmatpush2.msra.mxu0 0.0
  %543 = vmatprep.subr.mxu0 0.0
  %544 = vmatpush2.msra.mxu0 0.0
  %545 = vmatprep.subr.mxu0 0.0
  %546 = vmatpush2.msra.mxu0 0.0
  %547 = vmatprep.subr.mxu0 0.0
  %548 = vmatpush2.msra.mxu0 0.0
  %549 = vmatprep.subr.mxu0 0.0
  %550 = vmatpush2.msra.mxu0 0.0
  %551 = vmatprep.mubr.f32.mxu0 0.0
  %552 = vmatmul.mubr.f32.gmra.mxu0 %v485
  %v553 = vpop.f32.mrf.mxu0
  %v554 = vadd.f32 %v319, %v553
  %v555 = vpop.f32.mrf.mxu0
  %556 = vdwg.mxu0
  %v557 = vtanh.pop %v554
  %559 = vrot.lane.b32.xlu0 %v557, 8
  %v560 = vpop.permute.xlu0 %559
  %562 = vst.msk [vmem:[#allocation2] sm:$0x3] %vm400, %v560
  %563 = vst.msk [vmem:[#allocation3 + $0x2] sm:$0x3] %vm312, %v557
  %v565 = vrot.slane %v480, 2
  %v566 = vsel %vm236, %v565, 0
  %568 = vmatprep.subr.mxu0 0.0
  %569 = vmatpush1.msra.mxu0 0.0
  %570 = vmatprep.subr.mxu0 0.0
  %571 = vmatpush1.msra.mxu0 0.0
  %572 = vmatprep.subr.mxu0 0.0
  %573 = vmatpush1.msra.mxu0 0.0
  %574 = vmatprep.subr.mxu0 0.0
  %575 = vmatpush1.msra.mxu0 0.0
  %576 = vmatprep.subr.mxu0 0.0
  %577 = vmatpush1.msra.mxu0 0.0
  %578 = vmatprep.subr.mxu0 0.0
  %579 = vmatpush1.msra.mxu0 0.0
  %580 = vmatprep.subr.mxu0 0.0
  %581 = vmatpush1.msra.mxu0 0.0
  %582 = vmatprep.subr.mxu0 0.0
  %583 = vmatpush1.msra.mxu0 0.0
  %584 = vmatprep.subr.mxu0 0.0
  %585 = vmatpush1.msra.mxu0 0.0
  %586 = vmatprep.subr.mxu0 0.0
  %587 = vmatpush1.msra.mxu0 0.0
  %588 = vmatprep.subr.mxu0 0.0
  %589 = vmatpush1.msra.mxu0 0.0
  %590 = vmatprep.subr.mxu0 0.0
  %591 = vmatpush1.msra.mxu0 0.0
  %592 = vmatprep.subr.mxu0 0.0
  %593 = vmatpush1.msra.mxu0 0.0
  %594 = vmatprep.subr.mxu0 0.0
  %595 = vmatpush1.msra.mxu0 0.0
  %596 = vmatprep.subr.mxu0 0.0
  %597 = vmatpush1.msra.mxu0 0.0
  %598 = vmatprep.subr.mxu0 0.0
  %599 = vmatpush1.msra.mxu0 %v230
  %600 = vmatprep.subr.mxu0 0.0
  %601 = vmatpush2.msra.mxu0 0.0
  %602 = vmatprep.subr.mxu0 0.0
  %603 = vmatpush2.msra.mxu0 0.0
  %604 = vmatprep.subr.mxu0 0.0
  %605 = vmatpush2.msra.mxu0 0.0
  %606 = vmatprep.subr.mxu0 0.0
  %607 = vmatpush2.msra.mxu0 0.0
  %608 = vmatprep.subr.mxu0 0.0
  %609 = vmatpush2.msra.mxu0 0.0
  %610 = vmatprep.subr.mxu0 0.0
  %611 = vmatpush2.msra.mxu0 0.0
  %612 = vmatprep.subr.mxu0 0.0
  %613 = vmatpush2.msra.mxu0 0.0
  %614 = vmatprep.subr.mxu0 0.0
  %615 = vmatpush2.msra.mxu0 0.0
  %616 = vmatprep.subr.mxu0 0.0
  %617 = vmatpush2.msra.mxu0 0.0
  %618 = vmatprep.subr.mxu0 0.0
  %619 = vmatpush2.msra.mxu0 0.0
  %620 = vmatprep.subr.mxu0 0.0
  %621 = vmatpush2.msra.mxu0 0.0
  %622 = vmatprep.subr.mxu0 0.0
  %623 = vmatpush2.msra.mxu0 0.0
  %624 = vmatprep.subr.mxu0 0.0
  %625 = vmatpush2.msra.mxu0 0.0
  %626 = vmatprep.subr.mxu0 0.0
  %627 = vmatpush2.msra.mxu0 0.0
  %628 = vmatprep.subr.mxu0 0.0
  %629 = vmatpush2.msra.mxu0 0.0
  %630 = vmatprep.subr.mxu0 0.0
  %631 = vmatpush2.msra.mxu0 0.0
  %632 = vmatprep.mubr.f32.mxu0 0.0
  %633 = vmatmul.mubr.f32.gmra.mxu0 %v566
  %v634 = vpop.f32.mrf.mxu0
  %v635 = vadd.f32 0.0, %v634
  %v636 = vpop.f32.mrf.mxu0
  %637 = vdwg.mxu0
  %v639 = vrot.slane %v635, 4
  %v641 = vadd.f32 %v222, %v639
  %v642 = vtanh.pop %v641
  %vm643 = vcmask 62468
  %644 = vst.msk [vmem:[#allocation2 - $0x4] sm:$0x30] %vm643, %v642
  %v645 = vld [vmem:[#allocation2] sm:$0x3]
  %v647 = vsel %vm321, %v645, 0
  %649 = vmatprep.subr.mxu0 0.0
  %650 = vmatpush1.msra.mxu0 0.0
  %651 = vmatprep.subr.mxu0 0.0
  %652 = vmatpush1.msra.mxu0 0.0
  %653 = vmatprep.subr.mxu0 0.0
  %654 = vmatpush1.msra.mxu0 0.0
  %655 = vmatprep.subr.mxu0 0.0
  %656 = vmatpush1.msra.mxu0 0.0
  %657 = vmatprep.subr.mxu0 0.0
  %658 = vmatpush1.msra.mxu0 0.0
  %659 = vmatprep.subr.mxu0 0.0
  %660 = vmatpush1.msra.mxu0 0.0
  %661 = vmatprep.subr.mxu0 0.0
  %662 = vmatpush1.msra.mxu0 0.0
  %663 = vmatprep.subr.mxu0 0.0
  %664 = vmatpush1.msra.mxu0 0.0
  %665 = vmatprep.subr.mxu0 0.0
  %666 = vmatpush1.msra.mxu0 0.0
  %667 = vmatprep.subr.mxu0 0.0
  %668 = vmatpush1.msra.mxu0 0.0
  %669 = vmatprep.subr.mxu0 0.0
  %670 = vmatpush1.msra.mxu0 0.0
  %671 = vmatprep.subr.mxu0 0.0
  %672 = vmatpush1.msra.mxu0 0.0
  %673 = vmatprep.subr.mxu0 0.0
  %674 = vmatpush1.msra.mxu0 0.0
  %675 = vmatprep.subr.mxu0 0.0
  %676 = vmatpush1.msra.mxu0 0.0
  %677 = vmatprep.subr.mxu0 0.0
  %678 = vmatpush1.msra.mxu0 %v232
  %679 = vmatprep.subr.mxu0 0.0
  %680 = vmatpush1.msra.mxu0 %v231
  %681 = vmatprep.subr.mxu0 0.0
  %682 = vmatpush2.msra.mxu0 0.0
  %683 = vmatprep.subr.mxu0 0.0
  %684 = vmatpush2.msra.mxu0 0.0
  %685 = vmatprep.subr.mxu0 0.0
  %686 = vmatpush2.msra.mxu0 0.0
  %687 = vmatprep.subr.mxu0 0.0
  %688 = vmatpush2.msra.mxu0 0.0
  %689 = vmatprep.subr.mxu0 0.0
  %690 = vmatpush2.msra.mxu0 0.0
  %691 = vmatprep.subr.mxu0 0.0
  %692 = vmatpush2.msra.mxu0 0.0
  %693 = vmatprep.subr.mxu0 0.0
  %694 = vmatpush2.msra.mxu0 0.0
  %695 = vmatprep.subr.mxu0 0.0
  %696 = vmatpush2.msra.mxu0 0.0
  %697 = vmatprep.subr.mxu0 0.0
  %698 = vmatpush2.msra.mxu0 0.0
  %699 = vmatprep.subr.mxu0 0.0
  %700 = vmatpush2.msra.mxu0 0.0
  %701 = vmatprep.subr.mxu0 0.0
  %702 = vmatpush2.msra.mxu0 0.0
  %703 = vmatprep.subr.mxu0 0.0
  %704 = vmatpush2.msra.mxu0 0.0
  %705 = vmatprep.subr.mxu0 0.0
  %706 = vmatpush2.msra.mxu0 0.0
  %707 = vmatprep.subr.mxu0 0.0
  %708 = vmatpush2.msra.mxu0 0.0
  %709 = vmatprep.subr.mxu0 0.0
  %710 = vmatpush2.msra.mxu0 0.0
  %711 = vmatprep.subr.mxu0 0.0
  %712 = vmatpush2.msra.mxu0 0.0
  %713 = vmatprep.mubr.f32.mxu0 0.0
  %714 = vmatmul.mubr.f32.gmra.mxu0 %v647
  %v715 = vpop.f32.mrf.mxu0
  %v716 = vadd.f32 %v319, %v715
  %v717 = vpop.f32.mrf.mxu0
  %718 = vdwg.mxu0
  %v719 = vtanh.pop %v716
  %721 = vrot.lane.b32.xlu0 %v719, 8
  %v722 = vpop.permute.xlu0 %721
  %724 = vst.msk [vmem:[#allocation2] sm:$0x3] %vm400, %v722
  %725 = vst.msk [vmem:[#allocation3 + $0x4] sm:$0x3] %vm312, %v719
  %v727 = vrot.slane %v642, 4
  %v728 = vsel %vm236, %v727, 0
  %730 = vmatprep.subr.mxu0 0.0
  %731 = vmatpush1.msra.mxu0 0.0
  %732 = vmatprep.subr.mxu0 0.0
  %733 = vmatpush1.msra.mxu0 0.0
  %734 = vmatprep.subr.mxu0 0.0
  %735 = vmatpush1.msra.mxu0 0.0
  %736 = vmatprep.subr.mxu0 0.0
  %737 = vmatpush1.msra.mxu0 0.0
  %738 = vmatprep.subr.mxu0 0.0
  %739 = vmatpush1.msra.mxu0 0.0
  %740 = vmatprep.subr.mxu0 0.0
  %741 = vmatpush1.msra.mxu0 0.0
  %742 = vmatprep.subr.mxu0 0.0
  %743 = vmatpush1.msra.mxu0 0.0
  %744 = vmatprep.subr.mxu0 0.0
  %745 = vmatpush1.msra.mxu0 0.0
  %746 = vmatprep.subr.mxu0 0.0
  %747 = vmatpush1.msra.mxu0 0.0
  %748 = vmatprep.subr.mxu0 0.0
  %749 = vmatpush1.msra.mxu0 0.0
  %750 = vmatprep.subr.mxu0 0.0
  %751 = vmatpush1.msra.mxu0 0.0
  %752 = vmatprep.subr.mxu0 0.0
  %753 = vmatpush1.msra.mxu0 0.0
  %754 = vmatprep.subr.mxu0 0.0
  %755 = vmatpush1.msra.mxu0 0.0
  %756 = vmatprep.subr.mxu0 0.0
  %757 = vmatpush1.msra.mxu0 0.0
  %758 = vmatprep.subr.mxu0 0.0
  %759 = vmatpush1.msra.mxu0 0.0
  %760 = vmatprep.subr.mxu0 0.0
  %761 = vmatpush1.msra.mxu0 %v230
  %762 = vmatprep.subr.mxu0 0.0
  %763 = vmatpush2.msra.mxu0 0.0
  %764 = vmatprep.subr.mxu0 0.0
  %765 = vmatpush2.msra.mxu0 0.0
  %766 = vmatprep.subr.mxu0 0.0
  %767 = vmatpush2.msra.mxu0 0.0
  %768 = vmatprep.subr.mxu0 0.0
  %769 = vmatpush2.msra.mxu0 0.0
  %770 = vmatprep.subr.mxu0 0.0
  %771 = vmatpush2.msra.mxu0 0.0
  %772 = vmatprep.subr.mxu0 0.0
  %773 = vmatpush2.msra.mxu0 0.0
  %774 = vmatprep.subr.mxu0 0.0
  %775 = vmatpush2.msra.mxu0 0.0
  %776 = vmatprep.subr.mxu0 0.0
  %777 = vmatpush2.msra.mxu0 0.0
  %778 = vmatprep.subr.mxu0 0.0
  %779 = vmatpush2.msra.mxu0 0.0
  %780 = vmatprep.subr.mxu0 0.0
  %781 = vmatpush2.msra.mxu0 0.0
  %782 = vmatprep.subr.mxu0 0.0
  %783 = vmatpush2.msra.mxu0 0.0
  %784 = vmatprep.subr.mxu0 0.0
  %785 = vmatpush2.msra.mxu0 0.0
  %786 = vmatprep.subr.mxu0 0.0
  %787 = vmatpush2.msra.mxu0 0.0
  %788 = vmatprep.subr.mxu0 0.0
  %789 = vmatpush2.msra.mxu0 0.0
  %790 = vmatprep.subr.mxu0 0.0
  %791 = vmatpush2.msra.mxu0 0.0
  %792 = vmatprep.subr.mxu0 0.0
  %793 = vmatpush2.msra.mxu0 0.0
  %794 = vmatprep.mubr.f32.mxu0 0.0
  %795 = vmatmul.mubr.f32.gmra.mxu0 %v728
  %v796 = vpop.f32.mrf.mxu0
  %v797 = vadd.f32 0.0, %v796
  %v798 = vpop.f32.mrf.mxu0
  %799 = vdwg.mxu0
  %v801 = vrot.slane %v797, 2
  %v803 = vadd.f32 %v222, %v801
  %v804 = vtanh.pop %v803
  %vm805 = vcmask 64518
  %806 = vst.msk [vmem:[#allocation2 - $0x6] sm:$0xc0] %vm805, %v804
  %v807 = vld [vmem:[#allocation2] sm:$0x3]
  %v809 = vsel %vm321, %v807, 0
  %811 = vmatprep.subr.mxu0 0.0
  %812 = vmatpush1.msra.mxu0 0.0
  %813 = vmatprep.subr.mxu0 0.0
  %814 = vmatpush1.msra.mxu0 0.0
  %815 = vmatprep.subr.mxu0 0.0
  %816 = vmatpush1.msra.mxu0 0.0
  %817 = vmatprep.subr.mxu0 0.0
  %818 = vmatpush1.msra.mxu0 0.0
  %819 = vmatprep.subr.mxu0 0.0
  %820 = vmatpush1.msra.mxu0 0.0
  %821 = vmatprep.subr.mxu0 0.0
  %822 = vmatpush1.msra.mxu0 0.0
  %823 = vmatprep.subr.mxu0 0.0
  %824 = vmatpush1.msra.mxu0 0.0
  %825 = vmatprep.subr.mxu0 0.0
  %826 = vmatpush1.msra.mxu0 0.0
  %827 = vmatprep.subr.mxu0 0.0
  %828 = vmatpush1.msra.mxu0 0.0
  %829 = vmatprep.subr.mxu0 0.0
  %830 = vmatpush1.msra.mxu0 0.0
  %831 = vmatprep.subr.mxu0 0.0
  %832 = vmatpush1.msra.mxu0 0.0
  %833 = vmatprep.subr.mxu0 0.0
  %834 = vmatpush1.msra.mxu0 0.0
  %835 = vmatprep.subr.mxu0 0.0
  %836 = vmatpush1.msra.mxu0 0.0
  %837 = vmatprep.subr.mxu0 0.0
  %838 = vmatpush1.msra.mxu0 0.0
  %839 = vmatprep.subr.mxu0 0.0
  %840 = vmatpush1.msra.mxu0 %v232
  %841 = vmatprep.subr.mxu0 0.0
  %842 = vmatpush1.msra.mxu0 %v231
  %843 = vmatprep.subr.mxu0 0.0
  %844 = vmatpush2.msra.mxu0 0.0
  %845 = vmatprep.subr.mxu0 0.0
  %846 = vmatpush2.msra.mxu0 0.0
  %847 = vmatprep.subr.mxu0 0.0
  %848 = vmatpush2.msra.mxu0 0.0
  %849 = vmatprep.subr.mxu0 0.0
  %850 = vmatpush2.msra.mxu0 0.0
  %851 = vmatprep.subr.mxu0 0.0
  %852 = vmatpush2.msra.mxu0 0.0
  %853 = vmatprep.subr.mxu0 0.0
  %854 = vmatpush2.msra.mxu0 0.0
  %855 = vmatprep.subr.mxu0 0.0
  %856 = vmatpush2.msra.mxu0 0.0
  %857 = vmatprep.subr.mxu0 0.0
  %858 = vmatpush2.msra.mxu0 0.0
  %859 = vmatprep.subr.mxu0 0.0
  %860 = vmatpush2.msra.mxu0 0.0
  %861 = vmatprep.subr.mxu0 0.0
  %862 = vmatpush2.msra.mxu0 0.0
  %863 = vmatprep.subr.mxu0 0.0
  %864 = vmatpush2.msra.mxu0 0.0
  %865 = vmatprep.subr.mxu0 0.0
  %866 = vmatpush2.msra.mxu0 0.0
  %867 = vmatprep.subr.mxu0 0.0
  %868 = vmatpush2.msra.mxu0 0.0
  %869 = vmatprep.subr.mxu0 0.0
  %870 = vmatpush2.msra.mxu0 0.0
  %871 = vmatprep.subr.mxu0 0.0
  %872 = vmatpush2.msra.mxu0 0.0
  %873 = vmatprep.subr.mxu0 0.0
  %874 = vmatpush2.msra.mxu0 0.0
  %875 = vmatprep.mubr.f32.mxu0 0.0
  %876 = vmatmul.mubr.f32.gmra.mxu0 %v809
  %v877 = vpop.f32.mrf.mxu0
  %v878 = vadd.f32 %v319, %v877
  %v879 = vpop.f32.mrf.mxu0
  %880 = vdwg.mxu0
  %v881 = vtanh.pop %v878
  %883 = vrot.lane.b32.xlu0 %v881, 8
  %v884 = vpop.permute.xlu0 %883
  %886 = vst.msk [vmem:[#allocation2] sm:$0x3] %vm400, %v884
  %887 = vst.msk [vmem:[#allocation3 + $0x6] sm:$0x3] %vm312, %v881
  %v889 = vrot.slane %v804, 6
  %v890 = vsel %vm236, %v889, 0
  %892 = vmatprep.subr.mxu0 0.0
  %893 = vmatpush1.msra.mxu0 0.0
  %894 = vmatprep.subr.mxu0 0.0
  %895 = vmatpush1.msra.mxu0 0.0
  %896 = vmatprep.subr.mxu0 0.0
  %897 = vmatpush1.msra.mxu0 0.0
  %898 = vmatprep.subr.mxu0 0.0
  %899 = vmatpush1.msra.mxu0 0.0
  %900 = vmatprep.subr.mxu0 0.0
  %901 = vmatpush1.msra.mxu0 0.0
  %902 = vmatprep.subr.mxu0 0.0
  %903 = vmatpush1.msra.mxu0 0.0
  %904 = vmatprep.subr.mxu0 0.0
  %905 = vmatpush1.msra.mxu0 0.0
  %906 = vmatprep.subr.mxu0 0.0
  %907 = vmatpush1.msra.mxu0 0.0
  %908 = vmatprep.subr.mxu0 0.0
  %909 = vmatpush1.msra.mxu0 0.0
  %910 = vmatprep.subr.mxu0 0.0
  %911 = vmatpush1.msra.mxu0 0.0
  %912 = vmatprep.subr.mxu0 0.0
  %913 = vmatpush1.msra.mxu0 0.0
  %914 = vmatprep.subr.mxu0 0.0
  %915 = vmatpush1.msra.mxu0 0.0
  %916 = vmatprep.subr.mxu0 0.0
  %917 = vmatpush1.msra.mxu0 0.0
  %918 = vmatprep.subr.mxu0 0.0
  %919 = vmatpush1.msra.mxu0 0.0
  %920 = vmatprep.subr.mxu0 0.0
  %921 = vmatpush1.msra.mxu0 0.0
  %922 = vmatprep.subr.mxu0 0.0
  %923 = vmatpush1.msra.mxu0 %v230
  %924 = vmatprep.subr.mxu0 0.0
  %925 = vmatpush2.msra.mxu0 0.0
  %926 = vmatprep.subr.mxu0 0.0
  %927 = vmatpush2.msra.mxu0 0.0
  %928 = vmatprep.subr.mxu0 0.0
  %929 = vmatpush2.msra.mxu0 0.0
  %930 = vmatprep.subr.mxu0 0.0
  %931 = vmatpush2.msra.mxu0 0.0
  %932 = vmatprep.subr.mxu0 0.0
  %933 = vmatpush2.msra.mxu0 0.0
  %934 = vmatprep.subr.mxu0 0.0
  %935 = vmatpush2.msra.mxu0 0.0
  %936 = vmatprep.subr.mxu0 0.0
  %937 = vmatpush2.msra.mxu0 0.0
  %938 = vmatprep.subr.mxu0 0.0
  %939 = vmatpush2.msra.mxu0 0.0
  %940 = vmatprep.subr.mxu0 0.0
  %941 = vmatpush2.msra.mxu0 0.0
  %942 = vmatprep.subr.mxu0 0.0
  %943 = vmatpush2.msra.mxu0 0.0
  %944 = vmatprep.subr.mxu0 0.0
  %945 = vmatpush2.msra.mxu0 0.0
  %946 = vmatprep.subr.mxu0 0.0
  %947 = vmatpush2.msra.mxu0 0.0
  %948 = vmatprep.subr.mxu0 0.0
  %949 = vmatpush2.msra.mxu0 0.0
  %950 = vmatprep.subr.mxu0 0.0
  %951 = vmatpush2.msra.mxu0 0.0
  %952 = vmatprep.subr.mxu0 0.0
  %953 = vmatpush2.msra.mxu0 0.0
  %954 = vmatprep.subr.mxu0 0.0
  %955 = vmatpush2.msra.mxu0 0.0
  %956 = vmatprep.mubr.f32.mxu0 0.0
  %957 = vmatmul.mubr.f32.gmra.mxu0 %v890
  %v958 = vpop.f32.mrf.mxu0
  %v959 = vadd.f32 0.0, %v958
  %v960 = vpop.f32.mrf.mxu0
  %961 = vdwg.mxu0
  %v962 = vadd.f32 %v227, %v959
  %v963 = vtanh.pop %v962
  %964 = vst.msk [vmem:[#allocation2] sm:$0x3] %vm312, %v963
  %v965 = vld [vmem:[#allocation2] sm:$0x3]
  %v967 = vsel %vm321, %v965, 0
  %969 = vmatprep.subr.mxu0 0.0
  %970 = vmatpush1.msra.mxu0 0.0
  %971 = vmatprep.subr.mxu0 0.0
  %972 = vmatpush1.msra.mxu0 0.0
  %973 = vmatprep.subr.mxu0 0.0
  %974 = vmatpush1.msra.mxu0 0.0
  %975 = vmatprep.subr.mxu0 0.0
  %976 = vmatpush1.msra.mxu0 0.0
  %977 = vmatprep.subr.mxu0 0.0
  %978 = vmatpush1.msra.mxu0 0.0
  %979 = vmatprep.subr.mxu0 0.0
  %980 = vmatpush1.msra.mxu0 0.0
  %981 = vmatprep.subr.mxu0 0.0
  %982 = vmatpush1.msra.mxu0 0.0
  %983 = vmatprep.subr.mxu0 0.0
  %984 = vmatpush1.msra.mxu0 0.0
  %985 = vmatprep.subr.mxu0 0.0
  %986 = vmatpush1.msra.mxu0 0.0
  %987 = vmatprep.subr.mxu0 0.0
  %988 = vmatpush1.msra.mxu0 0.0
  %989 = vmatprep.subr.mxu0 0.0
  %990 = vmatpush1.msra.mxu0 0.0
  %991 = vmatprep.subr.mxu0 0.0
  %992 = vmatpush1.msra.mxu0 0.0
  %993 = vmatprep.subr.mxu0 0.0
  %994 = vmatpush1.msra.mxu0 0.0
  %995 = vmatprep.subr.mxu0 0.0
  %996 = vmatpush1.msra.mxu0 0.0
  %997 = vmatprep.subr.mxu0 0.0
  %998 = vmatpush1.msra.mxu0 %v232
  %999 = vmatprep.subr.mxu0 0.0
  %1000 = vmatpush1.msra.mxu0 %v231
  %1001 = vmatprep.subr.mxu0 0.0
  %1002 = vmatpush2.msra.mxu0 0.0
  %1003 = vmatprep.subr.mxu0 0.0
  %1004 = vmatpush2.msra.mxu0 0.0
  %1005 = vmatprep.subr.mxu0 0.0
  %1006 = vmatpush2.msra.mxu0 0.0
  %1007 = vmatprep.subr.mxu0 0.0
  %1008 = vmatpush2.msra.mxu0 0.0
  %1009 = vmatprep.subr.mxu0 0.0
  %1010 = vmatpush2.msra.mxu0 0.0
  %1011 = vmatprep.subr.mxu0 0.0
  %1012 = vmatpush2.msra.mxu0 0.0
  %1013 = vmatprep.subr.mxu0 0.0
  %1014 = vmatpush2.msra.mxu0 0.0
  %1015 = vmatprep.subr.mxu0 0.0
  %1016 = vmatpush2.msra.mxu0 0.0
  %1017 = vmatprep.subr.mxu0 0.0
  %1018 = vmatpush2.msra.mxu0 0.0
  %1019 = vmatprep.subr.mxu0 0.0
  %1020 = vmatpush2.msra.mxu0 0.0
  %1021 = vmatprep.subr.mxu0 0.0
  %1022 = vmatpush2.msra.mxu0 0.0
  %1023 = vmatprep.subr.mxu0 0.0
  %1024 = vmatpush2.msra.mxu0 0.0
  %1025 = vmatprep.subr.mxu0 0.0
  %1026 = vmatpush2.msra.mxu0 0.0
  %1027 = vmatprep.subr.mxu0 0.0
  %1028 = vmatpush2.msra.mxu0 0.0
  %1029 = vmatprep.subr.mxu0 0.0
  %1030 = vmatpush2.msra.mxu0 0.0
  %1031 = vmatprep.subr.mxu0 0.0
  %1032 = vmatpush2.msra.mxu0 0.0
  %1033 = vmatprep.mubr.f32.mxu0 0.0
  %1034 = vmatmul.mubr.f32.gmra.mxu0 %v967
  %v1035 = vpop.f32.mrf.mxu0
  %v1036 = vadd.f32 %v319, %v1035
  %v1037 = vpop.f32.mrf.mxu0
  %1038 = vdwg.mxu0
  %v1039 = vtanh.pop %v1036
  %1041 = vrot.lane.b32.xlu0 %v1039, 8
  %v1042 = vpop.permute.xlu0 %1041
  %1044 = vst.msk [vmem:[#allocation2] sm:$0x3] %vm400, %v1042
  %1045 = vst.msk [vmem:[#allocation3 + $0x8] sm:$0x3] %vm312, %v1039
  %v1047 = vsel %vm236, %v963, 0
  %1049 = vmatprep.subr.mxu0 0.0
  %1050 = vmatpush1.msra.mxu0 0.0
  %1051 = vmatprep.subr.mxu0 0.0
  %1052 = vmatpush1.msra.mxu0 0.0
  %1053 = vmatprep.subr.mxu0 0.0
  %1054 = vmatpush1.msra.mxu0 0.0
  %1055 = vmatprep.subr.mxu0 0.0
  %1056 = vmatpush1.msra.mxu0 0.0
  %1057 = vmatprep.subr.mxu0 0.0
  %1058 = vmatpush1.msra.mxu0 0.0
  %1059 = vmatprep.subr.mxu0 0.0
  %1060 = vmatpush1.msra.mxu0 0.0
  %1061 = vmatprep.subr.mxu0 0.0
  %1062 = vmatpush1.msra.mxu0 0.0
  %1063 = vmatprep.subr.mxu0 0.0
  %1064 = vmatpush1.msra.mxu0 0.0
  %1065 = vmatprep.subr.mxu0 0.0
  %1066 = vmatpush1.msra.mxu0 0.0
  %1067 = vmatprep.subr.mxu0 0.0
  %1068 = vmatpush1.msra.mxu0 0.0
  %1069 = vmatprep.subr.mxu0 0.0
  %1070 = vmatpush1.msra.mxu0 0.0
  %1071 = vmatprep.subr.mxu0 0.0
  %1072 = vmatpush1.msra.mxu0 0.0
  %1073 = vmatprep.subr.mxu0 0.0
  %1074 = vmatpush1.msra.mxu0 0.0
  %1075 = vmatprep.subr.mxu0 0.0
  %1076 = vmatpush1.msra.mxu0 0.0
  %1077 = vmatprep.subr.mxu0 0.0
  %1078 = vmatpush1.msra.mxu0 0.0
  %1079 = vmatprep.subr.mxu0 0.0
  %1080 = vmatpush1.msra.mxu0 %v230
  %1081 = vmatprep.subr.mxu0 0.0
  %1082 = vmatpush2.msra.mxu0 0.0
  %1083 = vmatprep.subr.mxu0 0.0
  %1084 = vmatpush2.msra.mxu0 0.0
  %1085 = vmatprep.subr.mxu0 0.0
  %1086 = vmatpush2.msra.mxu0 0.0
  %1087 = vmatprep.subr.mxu0 0.0
  %1088 = vmatpush2.msra.mxu0 0.0
  %1089 = vmatprep.subr.mxu0 0.0
  %1090 = vmatpush2.msra.mxu0 0.0
  %1091 = vmatprep.subr.mxu0 0.0
  %1092 = vmatpush2.msra.mxu0 0.0
  %1093 = vmatprep.subr.mxu0 0.0
  %1094 = vmatpush2.msra.mxu0 0.0
  %1095 = vmatprep.subr.mxu0 0.0
  %1096 = vmatpush2.msra.mxu0 0.0
  %1097 = vmatprep.subr.mxu0 0.0
  %1098 = vmatpush2.msra.mxu0 0.0
  %1099 = vmatprep.subr.mxu0 0.0
  %1100 = vmatpush2.msra.mxu0 0.0
  %1101 = vmatprep.subr.mxu0 0.0
  %1102 = vmatpush2.msra.mxu0 0.0
  %1103 = vmatprep.subr.mxu0 0.0
  %1104 = vmatpush2.msra.mxu0 0.0
  %1105 = vmatprep.subr.mxu0 0.0
  %1106 = vmatpush2.msra.mxu0 0.0
  %1107 = vmatprep.subr.mxu0 0.0
  %1108 = vmatpush2.msra.mxu0 0.0
  %1109 = vmatprep.subr.mxu0 0.0
  %1110 = vmatpush2.msra.mxu0 0.0
  %1111 = vmatprep.subr.mxu0 0.0
  %1112 = vmatpush2.msra.mxu0 0.0
  %1113 = vmatprep.mubr.f32.mxu0 0.0
  %1114 = vmatmul.mubr.f32.gmra.mxu0 %v1047
  %v1115 = vpop.f32.mrf.mxu0
  %v1116 = vadd.f32 0.0, %v1115
  %v1117 = vpop.f32.mrf.mxu0
  %1118 = vdwg.mxu0
  %v1120 = vrot.slane %v1116, 6
  %v1122 = vadd.f32 %v227, %v1120
  %v1123 = vtanh.pop %v1122
  %1124 = vst.msk [vmem:[#allocation2 - $0x2] sm:$0xc] %vm481, %v1123
  %v1125 = vld [vmem:[#allocation2] sm:$0x3]
  %v1127 = vsel %vm321, %v1125, 0
  %1129 = vmatprep.subr.mxu0 0.0
  %1130 = vmatpush1.msra.mxu0 0.0
  %1131 = vmatprep.subr.mxu0 0.0
  %1132 = vmatpush1.msra.mxu0 0.0
  %1133 = vmatprep.subr.mxu0 0.0
  %1134 = vmatpush1.msra.mxu0 0.0
  %1135 = vmatprep.subr.mxu0 0.0
  %1136 = vmatpush1.msra.mxu0 0.0
  %1137 = vmatprep.subr.mxu0 0.0
  %1138 = vmatpush1.msra.mxu0 0.0
  %1139 = vmatprep.subr.mxu0 0.0
  %1140 = vmatpush1.msra.mxu0 0.0
  %1141 = vmatprep.subr.mxu0 0.0
  %1142 = vmatpush1.msra.mxu0 0.0
  %1143 = vmatprep.subr.mxu0 0.0
  %1144 = vmatpush1.msra.mxu0 0.0
  %1145 = vmatprep.subr.mxu0 0.0
  %1146 = vmatpush1.msra.mxu0 0.0
  %1147 = vmatprep.subr.mxu0 0.0
  %1148 = vmatpush1.msra.mxu0 0.0
  %1149 = vmatprep.subr.mxu0 0.0
  %1150 = vmatpush1.msra.mxu0 0.0
  %1151 = vmatprep.subr.mxu0 0.0
  %1152 = vmatpush1.msra.mxu0 0.0
  %1153 = vmatprep.subr.mxu0 0.0
  %1154 = vmatpush1.msra.mxu0 0.0
  %1155 = vmatprep.subr.mxu0 0.0
  %1156 = vmatpush1.msra.mxu0 0.0
  %1157 = vmatprep.subr.mxu0 0.0
  %1158 = vmatpush1.msra.mxu0 %v232
  %1159 = vmatprep.subr.mxu0 0.0
  %1160 = vmatpush1.msra.mxu0 %v231
  %1161 = vmatprep.subr.mxu0 0.0
  %1162 = vmatpush2.msra.mxu0 0.0
  %1163 = vmatprep.subr.mxu0 0.0
  %1164 = vmatpush2.msra.mxu0 0.0
  %1165 = vmatprep.subr.mxu0 0.0
  %1166 = vmatpush2.msra.mxu0 0.0
  %1167 = vmatprep.subr.mxu0 0.0
  %1168 = vmatpush2.msra.mxu0 0.0
  %1169 = vmatprep.subr.mxu0 0.0
  %1170 = vmatpush2.msra.mxu0 0.0
  %1171 = vmatprep.subr.mxu0 0.0
  %1172 = vmatpush2.msra.mxu0 0.0
  %1173 = vmatprep.subr.mxu0 0.0
  %1174 = vmatpush2.msra.mxu0 0.0
  %1175 = vmatprep.subr.mxu0 0.0
  %1176 = vmatpush2.msra.mxu0 0.0
  %1177 = vmatprep.subr.mxu0 0.0
  %1178 = vmatpush2.msra.mxu0 0.0
  %1179 = vmatprep.subr.mxu0 0.0
  %1180 = vmatpush2.msra.mxu0 0.0
  %1181 = vmatprep.subr.mxu0 0.0
  %1182 = vmatpush2.msra.mxu0 0.0
  %1183 = vmatprep.subr.mxu0 0.0
  %1184 = vmatpush2.msra.mxu0 0.0
  %1185 = vmatprep.subr.mxu0 0.0
  %1186 = vmatpush2.msra.mxu0 0.0
  %1187 = vmatprep.subr.mxu0 0.0
  %1188 = vmatpush2.msra.mxu0 0.0
  %1189 = vmatprep.subr.mxu0 0.0
  %1190 = vmatpush2.msra.mxu0 0.0
  %1191 = vmatprep.subr.mxu0 0.0
  %1192 = vmatpush2.msra.mxu0 0.0
  %1193 = vmatprep.mubr.f32.mxu0 0.0
  %1194 = vmatmul.mubr.f32.gmra.mxu0 %v1127
  %v1195 = vpop.f32.mrf.mxu0
  %v1196 = vadd.f32 %v319, %v1195
  %v1197 = vpop.f32.mrf.mxu0
  %1198 = vdwg.mxu0
  %v1199 = vtanh.pop %v1196
  %1201 = vrot.lane.b32.xlu0 %v1199, 8
  %v1202 = vpop.permute.xlu0 %1201
  %1204 = vst.msk [vmem:[#allocation2] sm:$0x3] %vm400, %v1202
  %1205 = vst.msk [vmem:[#allocation3 + $0xa] sm:$0x3] %vm312, %v1199
  %v1207 = vrot.slane %v1123, 2
  %v1208 = vsel %vm236, %v1207, 0
  %1210 = vmatprep.subr.mxu0 0.0
  %1211 = vmatpush1.msra.mxu0 0.0
  %1212 = vmatprep.subr.mxu0 0.0
  %1213 = vmatpush1.msra.mxu0 0.0
  %1214 = vmatprep.subr.mxu0 0.0
  %1215 = vmatpush1.msra.mxu0 0.0
  %1216 = vmatprep.subr.mxu0 0.0
  %1217 = vmatpush1.msra.mxu0 0.0
  %1218 = vmatprep.subr.mxu0 0.0
  %1219 = vmatpush1.msra.mxu0 0.0
  %1220 = vmatprep.subr.mxu0 0.0
  %1221 = vmatpush1.msra.mxu0 0.0
  %1222 = vmatprep.subr.mxu0 0.0
  %1223 = vmatpush1.msra.mxu0 0.0
  %1224 = vmatprep.subr.mxu0 0.0
  %1225 = vmatpush1.msra.mxu0 0.0
  %1226 = vmatprep.subr.mxu0 0.0
  %1227 = vmatpush1.msra.mxu0 0.0
  %1228 = vmatprep.subr.mxu0 0.0
  %1229 = vmatpush1.msra.mxu0 0.0
  %1230 = vmatprep.subr.mxu0 0.0
  %1231 = vmatpush1.msra.mxu0 0.0
  %1232 = vmatprep.subr.mxu0 0.0
  %1233 = vmatpush1.msra.mxu0 0.0
  %1234 = vmatprep.subr.mxu0 0.0
  %1235 = vmatpush1.msra.mxu0 0.0
  %1236 = vmatprep.subr.mxu0 0.0
  %1237 = vmatpush1.msra.mxu0 0.0
  %1238 = vmatprep.subr.mxu0 0.0
  %1239 = vmatpush1.msra.mxu0 0.0
  %1240 = vmatprep.subr.mxu0 0.0
  %1241 = vmatpush1.msra.mxu0 %v230
  %1242 = vmatprep.subr.mxu0 0.0
  %1243 = vmatpush2.msra.mxu0 0.0
  %1244 = vmatprep.subr.mxu0 0.0
  %1245 = vmatpush2.msra.mxu0 0.0
  %1246 = vmatprep.subr.mxu0 0.0
  %1247 = vmatpush2.msra.mxu0 0.0
  %1248 = vmatprep.subr.mxu0 0.0
  %1249 = vmatpush2.msra.mxu0 0.0
  %1250 = vmatprep.subr.mxu0 0.0
  %1251 = vmatpush2.msra.mxu0 0.0
  %1252 = vmatprep.subr.mxu0 0.0
  %1253 = vmatpush2.msra.mxu0 0.0
  %1254 = vmatprep.subr.mxu0 0.0
  %1255 = vmatpush2.msra.mxu0 0.0
  %1256 = vmatprep.subr.mxu0 0.0
  %1257 = vmatpush2.msra.mxu0 0.0
  %1258 = vmatprep.subr.mxu0 0.0
  %1259 = vmatpush2.msra.mxu0 0.0
  %1260 = vmatprep.subr.mxu0 0.0
  %1261 = vmatpush2.msra.mxu0 0.0
  %1262 = vmatprep.subr.mxu0 0.0
  %1263 = vmatpush2.msra.mxu0 0.0
  %1264 = vmatprep.subr.mxu0 0.0
  %1265 = vmatpush2.msra.mxu0 0.0
  %1266 = vmatprep.subr.mxu0 0.0
  %1267 = vmatpush2.msra.mxu0 0.0
  %1268 = vmatprep.subr.mxu0 0.0
  %1269 = vmatpush2.msra.mxu0 0.0
  %1270 = vmatprep.subr.mxu0 0.0
  %1271 = vmatpush2.msra.mxu0 0.0
  %1272 = vmatprep.subr.mxu0 0.0
  %1273 = vmatpush2.msra.mxu0 0.0
  %1274 = vmatprep.mubr.f32.mxu0 0.0
  %1275 = vmatmul.mubr.f32.gmra.mxu0 %v1208
  %v1276 = vpop.f32.mrf.mxu0
  %v1277 = vadd.f32 0.0, %v1276
  %v1278 = vpop.f32.mrf.mxu0
  %1279 = vdwg.mxu0
  %v1281 = vrot.slane %v1277, 4
  %v1283 = vadd.f32 %v227, %v1281
  %v1284 = vtanh.pop %v1283
  %1285 = vst.msk [vmem:[#allocation2 - $0x4] sm:$0x30] %vm643, %v1284
  %v1286 = vld [vmem:[#allocation2] sm:$0x3]
  %v1288 = vsel %vm321, %v1286, 0
  %1290 = vmatprep.subr.mxu0 0.0
  %1291 = vmatpush1.msra.mxu0 0.0
  %1292 = vmatprep.subr.mxu0 0.0
  %1293 = vmatpush1.msra.mxu0 0.0
  %1294 = vmatprep.subr.mxu0 0.0
  %1295 = vmatpush1.msra.mxu0 0.0
  %1296 = vmatprep.subr.mxu0 0.0
  %1297 = vmatpush1.msra.mxu0 0.0
  %1298 = vmatprep.subr.mxu0 0.0
  %1299 = vmatpush1.msra.mxu0 0.0
  %1300 = vmatprep.subr.mxu0 0.0
  %1301 = vmatpush1.msra.mxu0 0.0
  %1302 = vmatprep.subr.mxu0 0.0
  %1303 = vmatpush1.msra.mxu0 0.0
  %1304 = vmatprep.subr.mxu0 0.0
  %1305 = vmatpush1.msra.mxu0 0.0
  %1306 = vmatprep.subr.mxu0 0.0
  %1307 = vmatpush1.msra.mxu0 0.0
  %1308 = vmatprep.subr.mxu0 0.0
  %1309 = vmatpush1.msra.mxu0 0.0
  %1310 = vmatprep.subr.mxu0 0.0
  %1311 = vmatpush1.msra.mxu0 0.0
  %1312 = vmatprep.subr.mxu0 0.0
  %1313 = vmatpush1.msra.mxu0 0.0
  %1314 = vmatprep.subr.mxu0 0.0
  %1315 = vmatpush1.msra.mxu0 0.0
  %1316 = vmatprep.subr.mxu0 0.0
  %1317 = vmatpush1.msra.mxu0 0.0
  %1318 = vmatprep.subr.mxu0 0.0
  %1319 = vmatpush1.msra.mxu0 %v232
  %1320 = vmatprep.subr.mxu0 0.0
  %1321 = vmatpush1.msra.mxu0 %v231
  %1322 = vmatprep.subr.mxu0 0.0
  %1323 = vmatpush2.msra.mxu0 0.0
  %1324 = vmatprep.subr.mxu0 0.0
  %1325 = vmatpush2.msra.mxu0 0.0
  %1326 = vmatprep.subr.mxu0 0.0
  %1327 = vmatpush2.msra.mxu0 0.0
  %1328 = vmatprep.subr.mxu0 0.0
  %1329 = vmatpush2.msra.mxu0 0.0
  %1330 = vmatprep.subr.mxu0 0.0
  %1331 = vmatpush2.msra.mxu0 0.0
  %1332 = vmatprep.subr.mxu0 0.0
  %1333 = vmatpush2.msra.mxu0 0.0
  %1334 = vmatprep.subr.mxu0 0.0
  %1335 = vmatpush2.msra.mxu0 0.0
  %1336 = vmatprep.subr.mxu0 0.0
  %1337 = vmatpush2.msra.mxu0 0.0
  %1338 = vmatprep.subr.mxu0 0.0
  %1339 = vmatpush2.msra.mxu0 0.0
  %1340 = vmatprep.subr.mxu0 0.0
  %1341 = vmatpush2.msra.mxu0 0.0
  %1342 = vmatprep.subr.mxu0 0.0
  %1343 = vmatpush2.msra.mxu0 0.0
  %1344 = vmatprep.subr.mxu0 0.0
  %1345 = vmatpush2.msra.mxu0 0.0
  %1346 = vmatprep.subr.mxu0 0.0
  %1347 = vmatpush2.msra.mxu0 0.0
  %1348 = vmatprep.subr.mxu0 0.0
  %1349 = vmatpush2.msra.mxu0 0.0
  %1350 = vmatprep.subr.mxu0 0.0
  %1351 = vmatpush2.msra.mxu0 0.0
  %1352 = vmatprep.subr.mxu0 0.0
  %1353 = vmatpush2.msra.mxu0 0.0
  %1354 = vmatprep.mubr.f32.mxu0 0.0
  %1355 = vmatmul.mubr.f32.gmra.mxu0 %v1288
  %v1356 = vpop.f32.mrf.mxu0
  %v1357 = vadd.f32 %v319, %v1356
  %v1358 = vpop.f32.mrf.mxu0
  %1359 = vdwg.mxu0
  %v1360 = vtanh.pop %v1357
  %1362 = vrot.lane.b32.xlu0 %v1360, 8
  %v1363 = vpop.permute.xlu0 %1362
  %1365 = vst.msk [vmem:[#allocation2] sm:$0x3] %vm400, %v1363
  %1366 = vst.msk [vmem:[#allocation3 + $0xc] sm:$0x3] %vm312, %v1360
  %v1368 = vrot.slane %v1284, 4
  %v1369 = vsel %vm236, %v1368, 0
  %1371 = vmatprep.subr.mxu0 0.0
  %1372 = vmatpush1.msra.mxu0 0.0
  %1373 = vmatprep.subr.mxu0 0.0
  %1374 = vmatpush1.msra.mxu0 0.0
  %1375 = vmatprep.subr.mxu0 0.0
  %1376 = vmatpush1.msra.mxu0 0.0
  %1377 = vmatprep.subr.mxu0 0.0
  %1378 = vmatpush1.msra.mxu0 0.0
  %1379 = vmatprep.subr.mxu0 0.0
  %1380 = vmatpush1.msra.mxu0 0.0
  %1381 = vmatprep.subr.mxu0 0.0
  %1382 = vmatpush1.msra.mxu0 0.0
  %1383 = vmatprep.subr.mxu0 0.0
  %1384 = vmatpush1.msra.mxu0 0.0
  %1385 = vmatprep.subr.mxu0 0.0
  %1386 = vmatpush1.msra.mxu0 0.0
  %1387 = vmatprep.subr.mxu0 0.0
  %1388 = vmatpush1.msra.mxu0 0.0
  %1389 = vmatprep.subr.mxu0 0.0
  %1390 = vmatpush1.msra.mxu0 0.0
  %1391 = vmatprep.subr.mxu0 0.0
  %1392 = vmatpush1.msra.mxu0 0.0
  %1393 = vmatprep.subr.mxu0 0.0
  %1394 = vmatpush1.msra.mxu0 0.0
  %1395 = vmatprep.subr.mxu0 0.0
  %1396 = vmatpush1.msra.mxu0 0.0
  %1397 = vmatprep.subr.mxu0 0.0
  %1398 = vmatpush1.msra.mxu0 0.0
  %1399 = vmatprep.subr.mxu0 0.0
  %1400 = vmatpush1.msra.mxu0 0.0
  %1401 = vmatprep.subr.mxu0 0.0
  %1402 = vmatpush1.msra.mxu0 %v230
  %1403 = vmatprep.subr.mxu0 0.0
  %1404 = vmatpush2.msra.mxu0 0.0
  %1405 = vmatprep.subr.mxu0 0.0
  %1406 = vmatpush2.msra.mxu0 0.0
  %1407 = vmatprep.subr.mxu0 0.0
  %1408 = vmatpush2.msra.mxu0 0.0
  %1409 = vmatprep.subr.mxu0 0.0
  %1410 = vmatpush2.msra.mxu0 0.0
  %1411 = vmatprep.subr.mxu0 0.0
  %1412 = vmatpush2.msra.mxu0 0.0
  %1413 = vmatprep.subr.mxu0 0.0
  %1414 = vmatpush2.msra.mxu0 0.0
  %1415 = vmatprep.subr.mxu0 0.0
  %1416 = vmatpush2.msra.mxu0 0.0
  %1417 = vmatprep.subr.mxu0 0.0
  %1418 = vmatpush2.msra.mxu0 0.0
  %1419 = vmatprep.subr.mxu0 0.0
  %1420 = vmatpush2.msra.mxu0 0.0
  %1421 = vmatprep.subr.mxu0 0.0
  %1422 = vmatpush2.msra.mxu0 0.0
  %1423 = vmatprep.subr.mxu0 0.0
  %1424 = vmatpush2.msra.mxu0 0.0
  %1425 = vmatprep.subr.mxu0 0.0
  %1426 = vmatpush2.msra.mxu0 0.0
  %1427 = vmatprep.subr.mxu0 0.0
  %1428 = vmatpush2.msra.mxu0 0.0
  %1429 = vmatprep.subr.mxu0 0.0
  %1430 = vmatpush2.msra.mxu0 0.0
  %1431 = vmatprep.subr.mxu0 0.0
  %1432 = vmatpush2.msra.mxu0 0.0
  %1433 = vmatprep.subr.mxu0 0.0
  %1434 = vmatpush2.msra.mxu0 0.0
  %1435 = vmatprep.mubr.f32.mxu0 0.0
  %1436 = vmatmul.mubr.f32.gmra.mxu0 %v1369
  %v1437 = vpop.f32.mrf.mxu0
  %v1438 = vadd.f32 0.0, %v1437
  %v1439 = vpop.f32.mrf.mxu0
  %1440 = vdwg.mxu0
  %v1442 = vrot.slane %v1438, 2
  %v1444 = vadd.f32 %v227, %v1442
  %v1445 = vtanh.pop %v1444
  %1446 = vst.msk [vmem:[#allocation2 - $0x6] sm:$0xc0] %vm805, %v1445
  %v1447 = vld [vmem:[#allocation2] sm:$0x3]
  %v1449 = vsel %vm321, %v1447, 0
  %1451 = vmatprep.subr.mxu0 0.0
  %1452 = vmatpush1.msra.mxu0 0.0
  %1453 = vmatprep.subr.mxu0 0.0
  %1454 = vmatpush1.msra.mxu0 0.0
  %1455 = vmatprep.subr.mxu0 0.0
  %1456 = vmatpush1.msra.mxu0 0.0
  %1457 = vmatprep.subr.mxu0 0.0
  %1458 = vmatpush1.msra.mxu0 0.0
  %1459 = vmatprep.subr.mxu0 0.0
  %1460 = vmatpush1.msra.mxu0 0.0
  %1461 = vmatprep.subr.mxu0 0.0
  %1462 = vmatpush1.msra.mxu0 0.0
  %1463 = vmatprep.subr.mxu0 0.0
  %1464 = vmatpush1.msra.mxu0 0.0
  %1465 = vmatprep.subr.mxu0 0.0
  %1466 = vmatpush1.msra.mxu0 0.0
  %1467 = vmatprep.subr.mxu0 0.0
  %1468 = vmatpush1.msra.mxu0 0.0
  %1469 = vmatprep.subr.mxu0 0.0
  %1470 = vmatpush1.msra.mxu0 0.0
  %1471 = vmatprep.subr.mxu0 0.0
  %1472 = vmatpush1.msra.mxu0 0.0
  %1473 = vmatprep.subr.mxu0 0.0
  %1474 = vmatpush1.msra.mxu0 0.0
  %1475 = vmatprep.subr.mxu0 0.0
  %1476 = vmatpush1.msra.mxu0 0.0
  %1477 = vmatprep.subr.mxu0 0.0
  %1478 = vmatpush1.msra.mxu0 0.0
  %1479 = vmatprep.subr.mxu0 0.0
  %1480 = vmatpush1.msra.mxu0 %v232
  %1481 = vmatprep.subr.mxu0 0.0
  %1482 = vmatpush1.msra.mxu0 %v231
  %1483 = vmatprep.subr.mxu0 0.0
  %1484 = vmatpush2.msra.mxu0 0.0
  %1485 = vmatprep.subr.mxu0 0.0
  %1486 = vmatpush2.msra.mxu0 0.0
  %1487 = vmatprep.subr.mxu0 0.0
  %1488 = vmatpush2.msra.mxu0 0.0
  %1489 = vmatprep.subr.mxu0 0.0
  %1490 = vmatpush2.msra.mxu0 0.0
  %1491 = vmatprep.subr.mxu0 0.0
  %1492 = vmatpush2.msra.mxu0 0.0
  %1493 = vmatprep.subr.mxu0 0.0
  %1494 = vmatpush2.msra.mxu0 0.0
  %1495 = vmatprep.subr.mxu0 0.0
  %1496 = vmatpush2.msra.mxu0 0.0
  %1497 = vmatprep.subr.mxu0 0.0
  %1498 = vmatpush2.msra.mxu0 0.0
  %1499 = vmatprep.subr.mxu0 0.0
  %1500 = vmatpush2.msra.mxu0 0.0
  %1501 = vmatprep.subr.mxu0 0.0
  %1502 = vmatpush2.msra.mxu0 0.0
  %1503 = vmatprep.subr.mxu0 0.0
  %1504 = vmatpush2.msra.mxu0 0.0
  %1505 = vmatprep.subr.mxu0 0.0
  %1506 = vmatpush2.msra.mxu0 0.0
  %1507 = vmatprep.subr.mxu0 0.0
  %1508 = vmatpush2.msra.mxu0 0.0
  %1509 = vmatprep.subr.mxu0 0.0
  %1510 = vmatpush2.msra.mxu0 0.0
  %1511 = vmatprep.subr.mxu0 0.0
  %1512 = vmatpush2.msra.mxu0 0.0
  %1513 = vmatprep.subr.mxu0 0.0
  %1514 = vmatpush2.msra.mxu0 0.0
  %1515 = vmatprep.mubr.f32.mxu0 0.0
  %1516 = vmatmul.mubr.f32.gmra.mxu0 %v1449
  %v1517 = vpop.f32.mrf.mxu0
  %v1518 = vadd.f32 %v319, %v1517
  %v1519 = vpop.f32.mrf.mxu0
  %1520 = vdwg.mxu0
  %v1521 = vtanh.pop %v1518
  %1523 = vrot.lane.b32.xlu0 %v1521, 8
  %v1524 = vpop.permute.xlu0 %1523
  %1526 = vst.msk [vmem:[#allocation2] sm:$0x3] %vm400, %v1524
  %1527 = vst.msk [vmem:[#allocation3 + $0xe] sm:$0x3] %vm312, %v1521
  %v1528 = vld [vmem:[#allocation3] sm:$0xff]
  %v1529 = vld [vmem:[#allocation3 + $0x8] sm:$0xff]
  %v1530 = vld [vmem:[%s7] sm:$0xff]
  %v1531 = vld [vmem:[%s8] sm:$0x1]
  %v1533 = vlaneseq
  %v1534 = vshrl.u32 %v1533, 7
  %v1535 = vsub.s32 0, %v1534
  %v1536 = vrot.slane %v1531, %v1535
  %v1539 = vsel %vm236, %v1528, 0
  %v1542 = vsel %vm236, %v1529, 0
  %1544 = vmatprep.subr.mxu0 0.0
  %1545 = vmatpush1.msra.mxu0 0.0
  %1546 = vmatprep.subr.mxu0 0.0
  %1547 = vmatpush1.msra.mxu0 0.0
  %1548 = vmatprep.subr.mxu0 0.0
  %1549 = vmatpush1.msra.mxu0 0.0
  %1550 = vmatprep.subr.mxu0 0.0
  %1551 = vmatpush1.msra.mxu0 0.0
  %1552 = vmatprep.subr.mxu0 0.0
  %1553 = vmatpush1.msra.mxu0 0.0
  %1554 = vmatprep.subr.mxu0 0.0
  %1555 = vmatpush1.msra.mxu0 0.0
  %1556 = vmatprep.subr.mxu0 0.0
  %1557 = vmatpush1.msra.mxu0 0.0
  %1558 = vmatprep.subr.mxu0 0.0
  %1559 = vmatpush1.msra.mxu0 0.0
  %1560 = vmatprep.subr.mxu0 0.0
  %1561 = vmatpush1.msra.mxu0 0.0
  %1562 = vmatprep.subr.mxu0 0.0
  %1563 = vmatpush1.msra.mxu0 0.0
  %1564 = vmatprep.subr.mxu0 0.0
  %1565 = vmatpush1.msra.mxu0 0.0
  %1566 = vmatprep.subr.mxu0 0.0
  %1567 = vmatpush1.msra.mxu0 0.0
  %1568 = vmatprep.subr.mxu0 0.0
  %1569 = vmatpush1.msra.mxu0 0.0
  %1570 = vmatprep.subr.mxu0 0.0
  %1571 = vmatpush1.msra.mxu0 0.0
  %1572 = vmatprep.subr.mxu0 0.0
  %1573 = vmatpush1.msra.mxu0 0.0
  %1574 = vmatprep.subr.mxu0 0.0
  %1575 = vmatpush1.msra.mxu0 %v1530
  %1576 = vmatprep.subr.mxu0 0.0
  %1577 = vmatpush2.msra.mxu0 0.0
  %1578 = vmatprep.subr.mxu0 0.0
  %1579 = vmatpush2.msra.mxu0 0.0
  %1580 = vmatprep.subr.mxu0 0.0
  %1581 = vmatpush2.msra.mxu0 0.0
  %1582 = vmatprep.subr.mxu0 0.0
  %1583 = vmatpush2.msra.mxu0 0.0
  %1584 = vmatprep.subr.mxu0 0.0
  %1585 = vmatpush2.msra.mxu0 0.0
  %1586 = vmatprep.subr.mxu0 0.0
  %1587 = vmatpush2.msra.mxu0 0.0
  %1588 = vmatprep.subr.mxu0 0.0
  %1589 = vmatpush2.msra.mxu0 0.0
  %1590 = vmatprep.subr.mxu0 0.0
  %1591 = vmatpush2.msra.mxu0 0.0
  %1592 = vmatprep.subr.mxu0 0.0
  %1593 = vmatpush2.msra.mxu0 0.0
  %1594 = vmatprep.subr.mxu0 0.0
  %1595 = vmatpush2.msra.mxu0 0.0
  %1596 = vmatprep.subr.mxu0 0.0
  %1597 = vmatpush2.msra.mxu0 0.0
  %1598 = vmatprep.subr.mxu0 0.0
  %1599 = vmatpush2.msra.mxu0 0.0
  %1600 = vmatprep.subr.mxu0 0.0
  %1601 = vmatpush2.msra.mxu0 0.0
  %1602 = vmatprep.subr.mxu0 0.0
  %1603 = vmatpush2.msra.mxu0 0.0
  %1604 = vmatprep.subr.mxu0 0.0
  %1605 = vmatpush2.msra.mxu0 0.0
  %1606 = vmatprep.subr.mxu0 0.0
  %1607 = vmatpush2.msra.mxu0 0.0
  %1608 = vmatprep.mubr.f32.mxu0 0.0
  %1609 = vmatmul.mubr.f32.gmra.mxu0 %v1539
  %v1610 = vpop.f32.mrf.mxu0
  %v1611 = vadd.f32 %v1536, %v1610
  %v1612 = vpop.f32.mrf.mxu0
  %1613 = vmatprep.mubr.f32.mxu0 0.0
  %1614 = vmatmul.mubr.f32.gmra.mxu0 %v1542
  %v1615 = vpop.f32.mrf.mxu0
  %v1616 = vadd.f32 %v1536, %v1615
  %v1617 = vpop.f32.mrf.mxu0
  %1618 = vdwg.mxu0
  %1619 = vst.msk [vmem:[%s9] sm:$0xff] %vm49, %v1611
  %1620 = vst.msk [vmem:[%s9 + $0x8] sm:$0xff] %vm49, %v1616
  // Predicated region
  $region38: #{model_forward.1} parent=0 // pred_check
    _
  $region39: #{model_forward.1} parent=0 // pred_check_branch
    %1622 = sbr.rel (0) target = $region41
  $region40: #{model_forward.1} parent=0 // pred_region
    _
  $region41: #{model_forward.1} parent=0 // pred_fallthru
    _
  // Predicated region
  $region42: #{model_forward.1} parent=0 // pred_check
    _
  $region43: #{model_forward.1} parent=0 // pred_check_branch
    %1624 = sbr.rel (0) target = $region45
  $region44: #{model_forward.1} parent=0 // pred_region
    _
  $region45: #{model_forward.1} parent=0 // pred_fallthru
    _

</llo_original>
